<compile_context>
chip_gen: v7x
topology: tpu7x:2x2x1
jax: 0.10.0
libtpu: 0.0.40
codegen_flags: <defaults>
</compile_context>

<pallas_src>
import jax
import jax.numpy as jnp
from jax.experimental import pallas as pl
from jax.experimental.pallas import tpu as pltpu

LANE = 128
SUBLANE = 8


def _round_up(n, m):
    return ((n + m - 1) // m) * m


def _pad_dim(n):
    """Node-count dims: pad so a 512/256 tile divides them (large graphs) or to
    the 8-sublane minimum (small graphs)."""
    if n >= 4096:
        return _round_up(n, 512)
    if n >= 256:
        return _round_up(n, 256)
    return _round_up(n, SUBLANE)


def _pick_tile(n):
    if n >= 512 and n % 512 == 0:
        return 512
    if n % 256 == 0:
        return 256
    return n                      # < 256, multiple of 8 by construction


def _align_of(t):
    for a in (512, 256, 128, SUBLANE):
        if t % a == 0:
            return a
    return 1


def _pad2(x, rows, cols):
    r, c = x.shape
    if (r, c) == (rows, cols):
        return x
    return jnp.pad(x, ((0, rows - r), (0, cols - c)))


# ------------------------- generation-aware VMEM budgets ----------------------
def _detect_vmem_capacity_bytes():
    try:
        info = pltpu.get_tpu_info()
        for name in ("vmem_capacity_bytes", "vmem_size_bytes", "vmem_bytes"):
            v = getattr(info, name, None)
            if v:
                return int(v)
    except Exception:
        pass
    return 64 * 1024 * 1024       # conservative default: v7x per-TensorCore VMEM


_VMEM_CAPACITY = _detect_vmem_capacity_bytes()
# Leave headroom for compiler-internal scratch / DMA buffers:
#   v7x (64 MiB) -> 48 MiB limit;  v5e / v6e (128 MiB) -> 112 MiB limit.
VMEM_LIMIT_BYTES = int(min(max(_VMEM_CAPACITY - 16 * 1024 * 1024, 32 * 1024 * 1024),
                           112 * 1024 * 1024))
_KERNEL_VMEM_BUDGET = VMEM_LIMIT_BYTES - 4 * 1024 * 1024


# --------------------------- fused matmul + tanh (+sum) -----------------------
def _make_matmul_tanh_kernel(tk, x_resident, with_acc):
    k_align = _align_of(tk)

    def kernel(*refs):
        if with_acc:
            a_ref, x_ref, acc_in_ref, o_ref, acc_out_ref, psum_ref = refs
        else:
            a_ref, x_ref, o_ref, psum_ref = refs
            acc_in_ref = acc_out_ref = None
        k = pl.program_id(1)

        @pl.when(k == 0)
        def _init():
            psum_ref[...] = jnp.zeros_like(psum_ref)

        if x_resident:
            col0 = pl.multiple_of(k * tk, k_align)
            x_blk = x_ref[pl.ds(col0, tk), :]          # slice of VMEM-resident RHS
        else:
            x_blk = x_ref[...]                         # streamed K-slab

        # bf16 adjacency tile is upcast here; the dot itself is f32 x f32 -> f32.
        psum_ref[...] += jnp.dot(a_ref[...].astype(jnp.float32), x_blk,
                                 preferred_element_type=jnp.float32)

        @pl.when(k == pl.num_programs(1) - 1)
        def _finalize():
            h = jnp.tanh(psum_ref[...])
            o_ref[...] = h.astype(o_ref.dtype)
            if with_acc:
                acc_out_ref[...] = acc_in_ref[...] + h

    return kernel


def _matmul_vmem_bytes(tm, tk, Kp, Dp, with_acc, x_resident):
    b = 2 * tm * tk * 2            # bf16 adjacency tile, double-buffered
    b += 2 * tm * Dp * 4           # f32 output tile, double-buffered
    b += tm * Dp * 4               # f32 partial-sum scratch
    if with_acc:
        b += 4 * tm * Dp * 4       # acc_in + acc_out tiles, double-buffered
    b += (2 * Kp * Dp * 4) if x_resident else (2 * tk * Dp * 4)
    return b


def matmul_tanh(a_bf16, x, acc=None):
    """tanh(a @ x); optionally also returns acc + tanh(a @ x) (acc aliased).

    a_bf16: [Mp, Kp] bf16 (pre-padded, pre-cast once by the caller).
    x:      [Kp, Dp] f32 with Dp % 128 == 0.
    acc:    optional [Mp, Dp] f32 running layer-sum.
    """
    Mp, Kp = a_bf16.shape
    Kx, Dp = x.shape
    assert Kp == Kx and Dp % LANE == 0, (a_bf16.shape, x.shape)
    tm, tk = _pick_tile(Mp), _pick_tile(Kp)
    with_acc = acc is not None

    # Keep the whole RHS VMEM-resident when it fits: it is then fetched once
    # instead of once per row tile (the dominant bandwidth leak otherwise).
    x_resident = _matmul_vmem_bytes(tm, tk, Kp, Dp, with_acc, True) <= _KERNEL_VMEM_BUDGET

    in_specs = [pl.BlockSpec((tm, tk), lambda i, k: (i, k))]
    if x_resident:
        in_specs.append(pl.BlockSpec((Kp, Dp), lambda i, k: (0, 0)))
    else:
        in_specs.append(pl.BlockSpec((tk, Dp), lambda i, k: (k, 0)))

    out_specs = [pl.BlockSpec((tm, Dp), lambda i, k: (i, 0))]
    out_shape = [jax.ShapeDtypeStruct((Mp, Dp), jnp.float32)]
    operands = [a_bf16, x]
    io_aliases = {}
    if with_acc:
        in_specs.append(pl.BlockSpec((tm, Dp), lambda i, k: (i, 0)))
        out_specs.append(pl.BlockSpec((tm, Dp), lambda i, k: (i, 0)))
        out_shape.append(jax.ShapeDtypeStruct((Mp, Dp), jnp.float32))
        operands.append(acc)
        io_aliases = {2: 1}        # acc input aliases acc output (in-place sum)

    result = pl.pallas_call(
        _make_matmul_tanh_kernel(tk, x_resident, with_acc),
        out_shape=tuple(out_shape),
        grid_spec=pltpu.PrefetchScalarGridSpec(
            num_scalar_prefetch=0,
            grid=(Mp // tm, Kp // tk),                 # M parallel, K reduction last
            in_specs=in_specs,
            out_specs=tuple(out_specs),
            scratch_shapes=[pltpu.VMEM((tm, Dp), jnp.float32)],
        ),
        compiler_params=pltpu.CompilerParams(
            dimension_semantics=("parallel", "arbitrary"),
            vmem_limit_bytes=VMEM_LIMIT_BYTES,
        ),
        input_output_aliases=io_aliases,
    )(*operands)
    if with_acc:
        return result              # (tanh(a @ x), acc + tanh(a @ x))
    return result[0]


# ------------------- fused multi-layer propagation (agg_type == 0) ------------
def _make_fused_propagate_kernel(tm, tk):
    m_align = _align_of(tm)
    k_align = _align_of(tk)

    def kernel(adj_ref, h0_hbm, o_ref, h_ref, lsum_ref, psum_ref, dma_sem):
        l = pl.program_id(0)
        i = pl.program_id(1)
        k = pl.program_id(2)
        n_l = pl.num_programs(0)
        n_k = pl.num_programs(2)

        first_step = jnp.logical_and(l == 0, jnp.logical_and(i == 0, k == 0))

        @pl.when(first_step)
        def _init():
            # One-shot HBM -> VMEM copy of H0 (not pipelined: a constant-index
            # input block would be double-buffered at 2*Np*Dp*4 bytes).
            cp = pltpu.make_async_copy(h0_hbm, h_ref.at[0], dma_sem)
            cp.start()
            cp.wait()
            lsum_ref[...] = jnp.zeros_like(lsum_ref)

        @pl.when(k == 0)
        def _zero_psum():
            psum_ref[...] = jnp.zeros_like(psum_ref)

        row0 = pl.multiple_of(i * tm, m_align)
        col0 = pl.multiple_of(k * tk, k_align)
        a = adj_ref[...].astype(jnp.float32)           # bf16 tile -> f32 operands

        def layer_step(src, dst):
            psum_ref[...] += jnp.dot(a, h_ref[src, pl.ds(col0, tk), :],
                                     preferred_element_type=jnp.float32)

            @pl.when(k == n_k - 1)
            def _finalize_tile():
                h_new = jnp.tanh(psum_ref[...])
                h_ref[dst, pl.ds(row0, tm), :] = h_new
                new_sum = lsum_ref[pl.ds(row0, tm), :] + h_new
                lsum_ref[pl.ds(row0, tm), :] = new_sum

                @pl.when(l == n_l - 1)                 # store only on last layer
                def _store():
                    o_ref[...] = new_sum.astype(o_ref.dtype)

        parity = l % 2

        @pl.when(parity == 0)
        def _even():
            layer_step(0, 1)

        @pl.when(parity == 1)
        def _odd():
            layer_step(1, 0)

    return kernel


def _fused_vmem_bytes(Np, Dp, tm, tk):
    return (2 * Np * Dp * 4        # f32 H ping-pong (VMEM-resident across layers)
            + Np * Dp * 4          # f32 layer-sum accumulator
            + tm * Dp * 4          # f32 per-tile partial sum
            + 2 * tm * tk * 2      # bf16 adjacency tile, double-buffered
            + 2 * tm * Dp * 4)     # f32 output tile, double-buffered


def _fused_propagate(adj_bf16, h0, n_layers, tm, tk):
    Np, Dp = h0.shape
    return pl.pallas_call(
        _make_fused_propagate_kernel(tm, tk),
        out_shape=jax.ShapeDtypeStruct((Np, Dp), jnp.float32),
        grid_spec=pltpu.PrefetchScalarGridSpec(
            num_scalar_prefetch=0,
            grid=(n_layers, Np // tm, Np // tk),
            in_specs=[
                pl.BlockSpec((tm, tk), lambda l, i, k: (i, k)),  # adjacency tile
                pl.BlockSpec(memory_space=pl.ANY),               # H0 stays in HBM
            ],
            out_specs=pl.BlockSpec((tm, Dp), lambda l, i, k: (i, 0)),
            scratch_shapes=[
                pltpu.VMEM((2, Np, Dp), jnp.float32),   # H ping-pong
                pltpu.VMEM((Np, Dp), jnp.float32),      # sum over layers
                pltpu.VMEM((tm, Dp), jnp.float32),      # K-partial accumulator
                pltpu.SemaphoreType.DMA,                # H0 one-shot DMA
            ],
        ),
        compiler_params=pltpu.CompilerParams(
            # scratch state is carried across every axis -> strictly sequential
            dimension_semantics=("arbitrary", "arbitrary", "arbitrary"),
            vmem_limit_bytes=VMEM_LIMIT_BYTES,
        ),
    )(adj_bf16, h0)


# ------------------------------ forward-pass glue -----------------------------
def parallel_aggregate(item_emb, norm_inter, norm_adj, n_layers):
    """agg_type == 0 path of EGCF_Encoder.forward()."""
    U, I = norm_inter.shape
    N, D = U + I, item_emb.shape[1]
    assert norm_adj.shape == (N, N)
    Dp = _round_up(D, LANE)
    Up, Ip, Np = _pad_dim(U), _pad_dim(I), _pad_dim(N)

    # pad + cast the loop-invariant operands exactly once (bf16 storage halves
    # the dominant HBM stream; all in-kernel math is f32).
    inter_bf = _pad2(norm_inter, Up, Ip).astype(jnp.bfloat16)
    adj_bf = _pad2(norm_adj, Np, Np).astype(jnp.bfloat16)
    item_pad = _pad2(item_emb, Ip, Dp)                          # f32

    user_pad = matmul_tanh(inter_bf, item_pad)                  # tanh(R_norm @ E_item)

    h0 = jnp.concatenate([user_pad[:U], item_pad[:I]], axis=0)  # [N, Dp] f32
    h0_pad = _pad2(h0, Np, Dp)

    tm, tk = _pick_tile(Np), _pick_tile(Np)
    if _fused_vmem_bytes(Np, Dp, tm, tk) <= _KERNEL_VMEM_BUDGET:
        # all n_layers in one pallas_call; H stays resident in VMEM
        acc = _fused_propagate(adj_bf, h0_pad, n_layers, tm, tk)
    else:
        # graph too large for VMEM-resident H: per-layer kernels with the
        # layer-sum fused into the matmul kernel (acc aliased in place).
        h = h0_pad
        acc = jnp.zeros((Np, Dp), jnp.float32)
        for _ in range(n_layers):
            h, acc = matmul_tanh(adj_bf, h, acc=acc)

    return acc[:U, :D], acc[U:N, :D]


def alternating_aggregate(item_emb, norm_inter, n_layers):
    """agg_type == 1 path of EGCF_Encoder.forward()."""
    U, I = norm_inter.shape
    D = item_emb.shape[1]
    Dp = _round_up(D, LANE)
    Up, Ip = _pad_dim(U), _pad_dim(I)

    inter_bf = _pad2(norm_inter, Up, Ip).astype(jnp.bfloat16)   # R_norm, cast once
    inter_t_bf = inter_bf.T                                      # R_norm^T, materialized once
    item = _pad2(item_emb, Ip, Dp)                               # f32

    acc_u = jnp.zeros((Up, Dp), jnp.float32)
    acc_i = jnp.zeros((Ip, Dp), jnp.float32)
    for _ in range(n_layers):
        user, acc_u = matmul_tanh(inter_bf, item, acc=acc_u)    # tanh(R @ E_item), sum fused
        item, acc_i = matmul_tanh(inter_t_bf, user, acc=acc_i)  # tanh(R^T @ E_user), sum fused
    return acc_u[:U, :D], acc_i[:I, :D]


def egcf_forward(item_emb, norm_inter, norm_adj, n_layers, agg_type):
    if agg_type == 0:
        return parallel_aggregate(item_emb, norm_inter, norm_adj, n_layers)
    if agg_type == 1:
        return alternating_aggregate(item_emb, norm_inter, n_layers)
    raise ValueError("agg_type must be 0 or 1")


# ------------------------- deterministic setup --------------------------------
def build_synthetic_graph(key, user_num, item_num):
    """Dense stand-in for data.interaction_mat + the normalizations from __init__."""
    R = jax.random.bernoulli(key, p=0.25, shape=(user_num, item_num)).astype(jnp.float32)

    row_sum = R.sum(axis=1)
    col_sum = R.sum(axis=0)
    row_d_inv = jnp.where(row_sum > 0, row_sum ** -0.5, 0.0)
    col_d_inv = jnp.where(col_sum > 0, col_sum ** -0.5, 0.0)
    norm_inter = row_d_inv[:, None] * R * col_d_inv[None, :]

    N = user_num + item_num
    A = jnp.zeros((N, N), dtype=jnp.float32)
    A = A.at[:user_num, user_num:].set(R)
    A = A.at[user_num:, :user_num].set(R.T)
    deg = A.sum(axis=1)
    d_inv = jnp.where(deg > 0, deg ** -0.5, 0.0)
    norm_adj = d_inv[:, None] * A * d_inv[None, :]
    return norm_inter, norm_adj


def xavier_uniform(key, shape):
    rows, cols = shape
    bound = (6.0 / (rows + cols)) ** 0.5
    return jax.random.uniform(key, shape, dtype=jnp.float32, minval=-bound, maxval=bound)


# ------------------------- pure-JAX references ---------------------------------
# Mirror the kernels: adjacency values rounded through bf16 (storage dtype only),
# all matmuls / activations / sums in f32.
def _ref_parallel(item_emb, norm_inter, norm_adj, n_layers):
    U = norm_inter.shape[0]
    r = norm_inter.astype(jnp.bfloat16).astype(jnp.float32)
    a = norm_adj.astype(jnp.bfloat16).astype(jnp.float32)
    user = jnp.tanh(r @ item_emb)
    h = jnp.concatenate([user, item_emb], axis=0)
    acc = jnp.zeros_like(h)
    for _ in range(n_layers):
        h = jnp.tanh(a @ h)
        acc = acc + h
    return acc[:U], acc[U:]


def _ref_alternating(item_emb, norm_inter, n_layers):
    r = norm_inter.astype(jnp.bfloat16).astype(jnp.float32)
    rt = r.T
    item = item_emb
    acc_u = jnp.zeros((norm_inter.shape[0], item_emb.shape[1]), jnp.float32)
    acc_i = jnp.zeros((norm_inter.shape[1], item_emb.shape[1]), jnp.float32)
    for _ in range(n_layers):
        user = jnp.tanh(r @ item)
        item = jnp.tanh(rt @ user)
        acc_u = acc_u + user
        acc_i = acc_i + item
    return acc_u, acc_i


if __name__ == "__main__":
    user_num, item_num = 32, 48
    emb_size = 32
    n_layers = 3

    root = jax.random.PRNGKey(0)
    k_graph, k_emb = jax.random.split(root)

    norm_inter, norm_adj = build_synthetic_graph(k_graph, user_num, item_num)
    item_emb = xavier_uniform(k_emb, (item_num, emb_size))

    fwd = jax.jit(egcf_forward, static_argnums=(3, 4))
    users0, items0 = fwd(item_emb, norm_inter, norm_adj, n_layers, 0)  # parallel agg
    users1, items1 = fwd(item_emb, norm_inter, norm_adj, n_layers, 1)  # alternating agg
    jax.block_until_ready((users0, items0, users1, items1))

    assert users0.shape == (user_num, emb_size) and items0.shape == (item_num, emb_size)
    assert users1.shape == (user_num, emb_size) and items1.shape == (item_num, emb_size)

    ref_u0, ref_i0 = _ref_parallel(item_emb, norm_inter, norm_adj, n_layers)
    ref_u1, ref_i1 = _ref_alternating(item_emb, norm_inter, n_layers)

    tol = 2e-2  # bf16-stored adjacency, f32 MXU accumulation
    assert jnp.allclose(users0, ref_u0, atol=tol), float(jnp.max(jnp.abs(users0 - ref_u0)))
    assert jnp.allclose(items0, ref_i0, atol=tol), float(jnp.max(jnp.abs(items0 - ref_i0)))
    assert jnp.allclose(users1, ref_u1, atol=tol), float(jnp.max(jnp.abs(users1 - ref_u1)))
    assert jnp.allclose(items1, ref_i1, atol=tol), float(jnp.max(jnp.abs(items1 - ref_i1)))

    print("KERNEL_OK")
</pallas_src>

<mosaic_0001>
module attributes {stable_mosaic.version = 11 : i64} {
  func.func @kernel(%arg0: i32, %arg1: i32, %arg2: memref<32x48xbf16, #tpu.memory_space<vmem>>, %arg3: memref<48x128xf32, #tpu.memory_space<vmem>>, %arg4: memref<32x128xf32, #tpu.memory_space<vmem>>, %arg5: memref<32x128xf32, #tpu.memory_space<vmem>>) attributes {dimension_semantics = [#tpu.dimension_semantics<parallel>, #tpu.dimension_semantics<arbitrary>], iteration_bounds = array<i64: 1, 1>, scalar_prefetch = 0 : i64, scratch_operands = 1 : i64, tpu.core_type = #tpu.core_type<tc>, window_params = [{transform_indices = @transform_0, window_bounds = array<i64: 32, 48>}, {pipeline_mode = #tpu.pipeline_mode<synchronous>, transform_indices = @transform_1, window_bounds = array<i64: 48, 128>}, {transform_indices = @transform_2, window_bounds = array<i64: 32, 128>}]} {
    %c0_i32 = arith.constant 0 : i32
    %0 = arith.cmpi eq, %arg1, %c0_i32 : i32
    %1 = arith.extui %0 : i1 to i32
    %c0_i32_0 = arith.constant 0 : i32
    %2 = arith.cmpi ne, %1, %c0_i32_0 : i32
    scf.if %2 {
      %cst_9 = arith.constant 0.000000e+00 : f32
      %16 = vector.broadcast %cst_9 : f32 to vector<32x128xf32>
      %c0_10 = arith.constant 0 : index
      %c0_11 = arith.constant 0 : index
      %17 = vector.load %arg5[%c0_10, %c0_11] : memref<32x128xf32, #tpu.memory_space<vmem>>, vector<32x128xf32>
      tpu.vector_store %arg5[%c0_10, %c0_11], %16 {strides = array<i32>} : memref<32x128xf32, #tpu.memory_space<vmem>>, vector<32x128xf32>,
    } else {
    }
    %c48_i32 = arith.constant 48 : i32
    %3 = arith.muli %arg1, %c48_i32 : i32
    %4 = tpu.assume_multiple %3, 8 : i32
    %5 = arith.index_cast %4 : i32 to index
    %c0 = arith.constant 0 : index
    %6 = vector.load %arg3[%5, %c0] : memref<48x128xf32, #tpu.memory_space<vmem>>, vector<48x128xf32>
    %c0_1 = arith.constant 0 : index
    %c0_2 = arith.constant 0 : index
    %7 = vector.load %arg5[%c0_1, %c0_2] : memref<32x128xf32, #tpu.memory_space<vmem>>, vector<32x128xf32>
    %c0_3 = arith.constant 0 : index
    %c0_4 = arith.constant 0 : index
    %8 = vector.load %arg2[%c0_3, %c0_4] : memref<32x48xbf16, #tpu.memory_space<vmem>>, vector<32x48xbf16>
    %9 = arith.extf %8 : vector<32x48xbf16> to vector<32x48xf32>
    %cst = arith.constant dense<0.000000e+00> : vector<32x128xf32>
    %10 = tpu.matmul %9, %6, %cst {dimension_numbers = #tpu.dot_dimension_numbers<[1], [0], [0], [1], [0, 0, 1, 1], [], []>} : vector<32x48xf32>, vector<48x128xf32>, vector<32x128xf32> -> vector<32x128xf32>
    %11 = arith.addf %7, %10 : vector<32x128xf32>
    %c0_5 = arith.constant 0 : index
    %c0_6 = arith.constant 0 : index
    %12 = vector.load %arg5[%c0_5, %c0_6] : memref<32x128xf32, #tpu.memory_space<vmem>>, vector<32x128xf32>
    tpu.vector_store %arg5[%c0_5, %c0_6], %11 {strides = array<i32>} : memref<32x128xf32, #tpu.memory_space<vmem>>, vector<32x128xf32>,
    %c0_i32_7 = arith.constant 0 : i32
    %13 = arith.cmpi eq, %arg1, %c0_i32_7 : i32
    %14 = arith.extui %13 : i1 to i32
    %c0_i32_8 = arith.constant 0 : i32
    %15 = arith.cmpi ne, %14, %c0_i32_8 : i32
    scf.if %15 {
      %c0_9 = arith.constant 0 : index
      %c0_10 = arith.constant 0 : index
      %16 = vector.load %arg5[%c0_9, %c0_10] : memref<32x128xf32, #tpu.memory_space<vmem>>, vector<32x128xf32>
      %17 = math.tanh %16 : vector<32x128xf32>
      %c0_11 = arith.constant 0 : index
      %c0_12 = arith.constant 0 : index
      %18 = vector.load %arg4[%c0_11, %c0_12] : memref<32x128xf32, #tpu.memory_space<vmem>>, vector<32x128xf32>
      tpu.vector_store %arg4[%c0_11, %c0_12], %17 {strides = array<i32>} : memref<32x128xf32, #tpu.memory_space<vmem>>, vector<32x128xf32>,
    } else {
    }
    return
  }
  func.func @transform_0(%arg0: i32, %arg1: i32) -> (i32, i32) {
    %c0_i32 = arith.constant 0 : i32
    return %arg0, %arg1 : i32, i32
  }
  func.func @transform_1(%arg0: i32, %arg1: i32) -> (i32, i32) {
    %c0_i32 = arith.constant 0 : i32
    %c0_i32_0 = arith.constant 0 : i32
    %c0_i32_1 = arith.constant 0 : i32
    return %c0_i32, %c0_i32_0 : i32, i32
  }
  func.func @transform_2(%arg0: i32, %arg1: i32) -> (i32, i32) {
    %c0_i32 = arith.constant 0 : i32
    %c0_i32_0 = arith.constant 0 : i32
    return %arg0, %c0_i32 : i32, i32
  }
}

module attributes {stable_mosaic.version = 11 : i64} {
  func.func @kernel(%arg0: i32, %arg1: i32, %arg2: i32, %arg3: memref<80x80xbf16, #tpu.memory_space<vmem>>, %arg4: memref<80x128xf32, #tpu.memory_space<any>>, %arg5: memref<80x128xf32, #tpu.memory_space<vmem>>, %arg6: memref<2x80x128xf32, #tpu.memory_space<vmem>>, %arg7: memref<80x128xf32, #tpu.memory_space<vmem>>, %arg8: memref<80x128xf32, #tpu.memory_space<vmem>>, %arg9: memref<!tpu.dma_semaphore, #tpu.memory_space<semaphore_mem>>) attributes {dimension_semantics = [#tpu.dimension_semantics<arbitrary>, #tpu.dimension_semantics<arbitrary>, #tpu.dimension_semantics<arbitrary>], iteration_bounds = array<i64: 3, 1, 1>, scalar_prefetch = 0 : i64, scratch_operands = 4 : i64, tpu.core_type = #tpu.core_type<tc>, window_params = [{transform_indices = @transform_0, window_bounds = array<i64: 80, 80>}, {}, {transform_indices = @transform_2, window_bounds = array<i64: 80, 128>}]} {
    %c0_i32 = arith.constant 0 : i32
    %0 = arith.cmpi eq, %arg0, %c0_i32 : i32
    %c0_i32_0 = arith.constant 0 : i32
    %1 = arith.cmpi eq, %arg1, %c0_i32_0 : i32
    %c0_i32_1 = arith.constant 0 : i32
    %2 = arith.cmpi eq, %arg2, %c0_i32_1 : i32
    %3 = arith.andi %1, %2 : i1
    %4 = arith.andi %0, %3 : i1
    %5 = arith.extui %4 : i1 to i32
    %c0_i32_2 = arith.constant 0 : i32
    %6 = arith.cmpi ne, %5, %c0_i32_2 : i32
    scf.if %6 {
      %c0_i32_15 = arith.constant 0 : i32
      %c0_i32_16 = arith.constant 0 : i32
      %c0_i32_17 = arith.constant 0 : i32
      %32 = tpu.memref_slice %arg6[%c0_i32_15, %c0_i32_16, %c0_i32_17] : memref<2x80x128xf32, #tpu.memory_space<vmem>> -> memref<1x80x128xf32, #tpu.memory_space<vmem>>
      %33 = tpu.memref_squeeze %32 : memref<1x80x128xf32, #tpu.memory_space<vmem>> -> memref<80x128xf32, #tpu.memory_space<vmem>>
      tpu.enqueue_dma source(%arg4 : memref<80x128xf32, #tpu.memory_space<any>>) target(%33 : memref<80x128xf32, #tpu.memory_space<vmem>>) target_semaphore(%arg9 : memref<!tpu.dma_semaphore, #tpu.memory_space<semaphore_mem>>)
      %c0_i32_18 = arith.constant 0 : i32
      %c0_i32_19 = arith.constant 0 : i32
      %c0_i32_20 = arith.constant 0 : i32
      %34 = tpu.memref_slice %arg6[%c0_i32_18, %c0_i32_19, %c0_i32_20] : memref<2x80x128xf32, #tpu.memory_space<vmem>> -> memref<1x80x128xf32, #tpu.memory_space<vmem>>
      %35 = tpu.memref_squeeze %34 : memref<1x80x128xf32, #tpu.memory_space<vmem>> -> memref<80x128xf32, #tpu.memory_space<vmem>>
      tpu.wait_dma2 semaphore(%arg9 : memref<!tpu.dma_semaphore, #tpu.memory_space<semaphore_mem>>) src(%arg4 : memref<80x128xf32, #tpu.memory_space<any>>) dst(%35 : memref<80x128xf32, #tpu.memory_space<vmem>>)
      %cst = arith.constant 0.000000e+00 : f32
      %36 = vector.broadcast %cst : f32 to vector<80x128xf32>
      %c0_21 = arith.constant 0 : index
      %c0_22 = arith.constant 0 : index
      %37 = vector.load %arg7[%c0_21, %c0_22] : memref<80x128xf32, #tpu.memory_space<vmem>>, vector<80x128xf32>
      tpu.vector_store %arg7[%c0_21, %c0_22], %36 {strides = array<i32>} : memref<80x128xf32, #tpu.memory_space<vmem>>, vector<80x128xf32>,
    } else {
    }
    %c0_i32_3 = arith.constant 0 : i32
    %7 = arith.cmpi eq, %arg2, %c0_i32_3 : i32
    %8 = arith.extui %7 : i1 to i32
    %c0_i32_4 = arith.constant 0 : i32
    %9 = arith.cmpi ne, %8, %c0_i32_4 : i32
    scf.if %9 {
      %cst = arith.constant 0.000000e+00 : f32
      %32 = vector.broadcast %cst : f32 to vector<80x128xf32>
      %c0_15 = arith.constant 0 : index
      %c0_16 = arith.constant 0 : index
      %33 = vector.load %arg8[%c0_15, %c0_16] : memref<80x128xf32, #tpu.memory_space<vmem>>, vector<80x128xf32>
      tpu.vector_store %arg8[%c0_15, %c0_16], %32 {strides = array<i32>} : memref<80x128xf32, #tpu.memory_space<vmem>>, vector<80x128xf32>,
    } else {
    }
    %c80_i32 = arith.constant 80 : i32
    %10 = arith.muli %arg1, %c80_i32 : i32
    %11 = tpu.assume_multiple %10, 8 : i32
    %c80_i32_5 = arith.constant 80 : i32
    %12 = arith.muli %arg2, %c80_i32_5 : i32
    %13 = tpu.assume_multiple %12, 8 : i32
    %c0 = arith.constant 0 : index
    %c0_6 = arith.constant 0 : index
    %14 = vector.load %arg3[%c0, %c0_6] : memref<80x80xbf16, #tpu.memory_space<vmem>>, vector<80x80xbf16>
    %15 = arith.extf %14 : vector<80x80xbf16> to vector<80x80xf32>
    %c2_i32 = arith.constant 2 : i32
    %c0_i32_7 = arith.constant 0 : i32
    %16 = arith.cmpi eq, %c2_i32, %c0_i32_7 : i32
    %c1_i32 = arith.constant 1 : i32
    %17 = arith.select %16, %c1_i32, %c2_i32 : i32
    %18 = arith.remsi %arg0, %17 : i32
    %c0_i32_8 = arith.constant 0 : i32
    %19 = arith.cmpi ne, %18, %c0_i32_8 : i32
    %c0_i32_9 = arith.constant 0 : i32
    %20 = arith.cmpi slt, %18, %c0_i32_9 : i32
    %c0_i32_10 = arith.constant 0 : i32
    %21 = arith.cmpi slt, %17, %c0_i32_10 : i32
    %22 = arith.xori %20, %21 : i1
    %23 = arith.andi %22, %19 : i1
    %24 = arith.addi %18, %17 : i32
    %25 = arith.select %23, %24, %18 : i32
    %c0_i32_11 = arith.constant 0 : i32
    %26 = arith.cmpi eq, %25, %c0_i32_11 : i32
    %27 = arith.extui %26 : i1 to i32
    %c0_i32_12 = arith.constant 0 : i32
    %28 = arith.cmpi ne, %27, %c0_i32_12 : i32
    scf.if %28 {
      %c0_15 = arith.constant 0 : index
      %c0_16 = arith.constant 0 : index
      %32 = vector.load %arg8[%c0_15, %c0_16] : memref<80x128xf32, #tpu.memory_space<vmem>>, vector<80x128xf32>
      %c0_17 = arith.constant 0 : index
      %33 = arith.index_cast %13 : i32 to index
      %c0_18 = arith.constant 0 : index
      %34 = vector.load %arg6[%c0_17, %33, %c0_18] : memref<2x80x128xf32, #tpu.memory_space<vmem>>, vector<1x80x128xf32>
      %35 = vector.shape_cast %34 : vector<1x80x128xf32> to vector<80x128xf32>
      %cst = arith.constant dense<0.000000e+00> : vector<80x128xf32>
      %36 = tpu.matmul %15, %35, %cst {dimension_numbers = #tpu.dot_dimension_numbers<[1], [0], [0], [1], [0, 0, 1, 1], [], []>} : vector<80x80xf32>, vector<80x128xf32>, vector<80x128xf32> -> vector<80x128xf32>
      %37 = arith.addf %32, %36 : vector<80x128xf32>
      %c0_19 = arith.constant 0 : index
      %c0_20 = arith.constant 0 : index
      %38 = vector.load %arg8[%c0_19, %c0_20] : memref<80x128xf32, #tpu.memory_space<vmem>>, vector<80x128xf32>
      tpu.vector_store %arg8[%c0_19, %c0_20], %37 {strides = array<i32>} : memref<80x128xf32, #tpu.memory_space<vmem>>, vector<80x128xf32>,
      %c0_i32_21 = arith.constant 0 : i32
      %39 = arith.cmpi eq, %arg2, %c0_i32_21 : i32
      %40 = arith.extui %39 : i1 to i32
      %c0_i32_22 = arith.constant 0 : i32
      %41 = arith.cmpi ne, %40, %c0_i32_22 : i32
      scf.if %41 {
        %c0_23 = arith.constant 0 : index
        %c0_24 = arith.constant 0 : index
        %42 = vector.load %arg8[%c0_23, %c0_24] : memref<80x128xf32, #tpu.memory_space<vmem>>, vector<80x128xf32>
        %43 = math.tanh %42 : vector<80x128xf32>
        %c1 = arith.constant 1 : index
        %44 = arith.index_cast %11 : i32 to index
        %c0_25 = arith.constant 0 : index
        %45 = vector.load %arg6[%c1, %44, %c0_25] : memref<2x80x128xf32, #tpu.memory_space<vmem>>, vector<1x80x128xf32>
        %46 = vector.shape_cast %45 : vector<1x80x128xf32> to vector<80x128xf32>
        %47 = vector.shape_cast %43 : vector<80x128xf32> to vector<1x80x128xf32>
        tpu.vector_store %arg6[%c1, %44, %c0_25], %47 {strides = array<i32>} : memref<2x80x128xf32, #tpu.memory_space<vmem>>, vector<1x80x128xf32>,
        %48 = arith.index_cast %11 : i32 to index
        %c0_26 = arith.constant 0 : index
        %49 = vector.load %arg7[%48, %c0_26] : memref<80x128xf32, #tpu.memory_space<vmem>>, vector<80x128xf32>
        %50 = arith.addf %49, %43 : vector<80x128xf32>
        %51 = arith.index_cast %11 : i32 to index
        %c0_27 = arith.constant 0 : index
        %52 = vector.load %arg7[%51, %c0_27] : memref<80x128xf32, #tpu.memory_space<vmem>>, vector<80x128xf32>
        tpu.vector_store %arg7[%51, %c0_27], %50 {strides = array<i32>} : memref<80x128xf32, #tpu.memory_space<vmem>>, vector<80x128xf32>,
        %c2_i32_28 = arith.constant 2 : i32
        %53 = arith.cmpi eq, %arg0, %c2_i32_28 : i32
        %54 = arith.extui %53 : i1 to i32
        %c0_i32_29 = arith.constant 0 : i32
        %55 = arith.cmpi ne, %54, %c0_i32_29 : i32
        scf.if %55 {
          %c0_30 = arith.constant 0 : index
          %c0_31 = arith.constant 0 : index
          %56 = vector.load %arg5[%c0_30, %c0_31] : memref<80x128xf32, #tpu.memory_space<vmem>>, vector<80x128xf32>
          tpu.vector_store %arg5[%c0_30, %c0_31], %50 {strides = array<i32>} : memref<80x128xf32, #tpu.memory_space<vmem>>, vector<80x128xf32>,
        } else {
        }
      } else {
      }
    } else {
    }
    %c1_i32_13 = arith.constant 1 : i32
    %29 = arith.cmpi eq, %25, %c1_i32_13 : i32
    %30 = arith.extui %29 : i1 to i32
    %c0_i32_14 = arith.constant 0 : i32
    %31 = arith.cmpi ne, %30, %c0_i32_14 : i32
    scf.if %31 {
      %c0_15 = arith.constant 0 : index
      %c0_16 = arith.constant 0 : index
      %32 = vector.load %arg8[%c0_15, %c0_16] : memref<80x128xf32, #tpu.memory_space<vmem>>, vector<80x128xf32>
      %c1 = arith.constant 1 : index
      %33 = arith.index_cast %13 : i32 to index
      %c0_17 = arith.constant 0 : index
      %34 = vector.load %arg6[%c1, %33, %c0_17] : memref<2x80x128xf32, #tpu.memory_space<vmem>>, vector<1x80x128xf32>
      %35 = vector.shape_cast %34 : vector<1x80x128xf32> to vector<80x128xf32>
      %cst = arith.constant dense<0.000000e+00> : vector<80x128xf32>
      %36 = tpu.matmul %15, %35, %cst {dimension_numbers = #tpu.dot_dimension_numbers<[1], [0], [0], [1], [0, 0, 1, 1], [], []>} : vector<80x80xf32>, vector<80x128xf32>, vector<80x128xf32> -> vector<80x128xf32>
      %37 = arith.addf %32, %36 : vector<80x128xf32>
      %c0_18 = arith.constant 0 : index
      %c0_19 = arith.constant 0 : index
      %38 = vector.load %arg8[%c0_18, %c0_19] : memref<80x128xf32, #tpu.memory_space<vmem>>, vector<80x128xf32>
      tpu.vector_store %arg8[%c0_18, %c0_19], %37 {strides = array<i32>} : memref<80x128xf32, #tpu.memory_space<vmem>>, vector<80x128xf32>,
      %c0_i32_20 = arith.constant 0 : i32
      %39 = arith.cmpi eq, %arg2, %c0_i32_20 : i32
      %40 = arith.extui %39 : i1 to i32
      %c0_i32_21 = arith.constant 0 : i32
      %41 = arith.cmpi ne, %40, %c0_i32_21 : i32
      scf.if %41 {
        %c0_22 = arith.constant 0 : index
        %c0_23 = arith.constant 0 : index
        %42 = vector.load %arg8[%c0_22, %c0_23] : memref<80x128xf32, #tpu.memory_space<vmem>>, vector<80x128xf32>
        %43 = math.tanh %42 : vector<80x128xf32>
        %c0_24 = arith.constant 0 : index
        %44 = arith.index_cast %11 : i32 to index
        %c0_25 = arith.constant 0 : index
        %45 = vector.load %arg6[%c0_24, %44, %c0_25] : memref<2x80x128xf32, #tpu.memory_space<vmem>>, vector<1x80x128xf32>
        %46 = vector.shape_cast %45 : vector<1x80x128xf32> to vector<80x128xf32>
        %47 = vector.shape_cast %43 : vector<80x128xf32> to vector<1x80x128xf32>
        tpu.vector_store %arg6[%c0_24, %44, %c0_25], %47 {strides = array<i32>} : memref<2x80x128xf32, #tpu.memory_space<vmem>>, vector<1x80x128xf32>,
        %48 = arith.index_cast %11 : i32 to index
        %c0_26 = arith.constant 0 : index
        %49 = vector.load %arg7[%48, %c0_26] : memref<80x128xf32, #tpu.memory_space<vmem>>, vector<80x128xf32>
        %50 = arith.addf %49, %43 : vector<80x128xf32>
        %51 = arith.index_cast %11 : i32 to index
        %c0_27 = arith.constant 0 : index
        %52 = vector.load %arg7[%51, %c0_27] : memref<80x128xf32, #tpu.memory_space<vmem>>, vector<80x128xf32>
        tpu.vector_store %arg7[%51, %c0_27], %50 {strides = array<i32>} : memref<80x128xf32, #tpu.memory_space<vmem>>, vector<80x128xf32>,
        %c2_i32_28 = arith.constant 2 : i32
        %53 = arith.cmpi eq, %arg0, %c2_i32_28 : i32
        %54 = arith.extui %53 : i1 to i32
        %c0_i32_29 = arith.constant 0 : i32
        %55 = arith.cmpi ne, %54, %c0_i32_29 : i32
        scf.if %55 {
          %c0_30 = arith.constant 0 : index
          %c0_31 = arith.constant 0 : index
          %56 = vector.load %arg5[%c0_30, %c0_31] : memref<80x128xf32, #tpu.memory_space<vmem>>, vector<80x128xf32>
          tpu.vector_store %arg5[%c0_30, %c0_31], %50 {strides = array<i32>} : memref<80x128xf32, #tpu.memory_space<vmem>>, vector<80x128xf32>,
        } else {
        }
      } else {
      }
    } else {
    }
    return
  }
  func.func @transform_0(%arg0: i32, %arg1: i32, %arg2: i32) -> (i32, i32) {
    %c0_i32 = arith.constant 0 : i32
    return %arg1, %arg2 : i32, i32
  }
  func.func @transform_2(%arg0: i32, %arg1: i32, %arg2: i32) -> (i32, i32) {
    %c0_i32 = arith.constant 0 : i32
    %c0_i32_0 = arith.constant 0 : i32
    return %arg1, %c0_i32 : i32, i32
  }
}

</mosaic_0001>

<llo_original>
// kernel: egcf_forward.2
$region0: #{egcf_forward.2}
  #allocation0 [shape = 'u32[]', space=smem, size = 0x4, offset = 0x4, fixed_abs, tag = 'smem constant byte address 0x4 - core index']
  #allocation1 [shape = 'u32[144,128]{1,0:T(1,128)}', space=vmem, size = 0x12000, scoped, tag = 'internal scratch']
  #allocation2 [shape = 'f32[32,128]{1,0:T(8,128)}', space=vmem, size = 0x4000, scoped, tag = 'scratch operand']
  %s0 = inlined_call_operand.vmem [shape: bf16[32,48], index: 0, kind: input, shape index: {}]
  %s1 = inlined_call_operand.vmem [shape: f32[48,128], index: 1, kind: input, shape index: {}]
  %s2 = inlined_call_operand.vmem [shape: f32[32,128], index: 2, kind: output, shape index: {}]
  %s3 = sld [smem:[#allocation0]]
  $region26: #{egcf_forward.2} parent=0
    _
  %s5 = ssub.s32 1, %s3
  %s6 = scalar_select 0, %s5, %s3
  // Predicated region
  $region2: #{egcf_forward.2} parent=0 // pred_check
    _
  $region3: #{egcf_forward.2} parent=0 // pred_check_branch
    %8 = sbr.rel (0) target = $region5
  $region4: #{egcf_forward.2} parent=0 // pred_region
    _
  $region5: #{egcf_forward.2} parent=0 // pred_fallthru
    _
  // Predicated region
  $region6: #{egcf_forward.2} parent=0 // pred_check
    _
  $region7: #{egcf_forward.2} parent=0 // pred_check_branch
    %10 = sbr.rel (0) target = $region9
  $region8: #{egcf_forward.2} parent=0 // pred_region
    _
  $region9: #{egcf_forward.2} parent=0 // pred_fallthru
    _
  %p11 = scmp.eq.s32.totalorder 0, 0
  // Predicated region
  $region10: #{egcf_forward.2} parent=0 // pred_check
    %p12 = pneg %p11
  $region11: #{egcf_forward.2} parent=0 // pred_check_branch
    %14 = sbr.rel (%p12) target = $region13
  $region12: #{egcf_forward.2} parent=0 // pred_region
    %15 = vst [vmem:[#allocation2] sm:$0xff] 0.0
    %16 = vst [vmem:[#allocation2 + $0x8] sm:$0xff] 0.0
    %17 = vst [vmem:[#allocation2 + $0x10] sm:$0xff] 0.0
    %18 = vst [vmem:[#allocation2 + $0x18] sm:$0xff] 0.0
  $region13: #{egcf_forward.2} parent=0 // pred_fallthru
    _
  %s19 = smul.u32 0, 48
  %s20 = scalar_lea.vmem %s1, %s19
  %v21 = vld [vmem:[%s20] sm:$0xff]
  %v22 = vld [vmem:[%s20 + $0x8] sm:$0xff]
  %v23 = vld [vmem:[%s20 + $0x10] sm:$0xff]
  %v24 = vld [vmem:[%s20 + $0x18] sm:$0xff]
  %v25 = vld [vmem:[%s20 + $0x20] sm:$0xff]
  %v26 = vld [vmem:[%s20 + $0x28] sm:$0xff]
  %v27 = vld [vmem:[#allocation2] sm:$0xff]
  %v28 = vld [vmem:[#allocation2 + $0x8] sm:$0xff]
  %v29 = vld [vmem:[#allocation2 + $0x10] sm:$0xff]
  %v30 = vld [vmem:[#allocation2 + $0x18] sm:$0xff]
  %v31 = vld [vmem:[%s0] sm:$0xf]
  %v32 = vld [vmem:[%s0 + $0x4] sm:$0xf]
  %v33 = vld [vmem:[%s0 + $0x8] sm:$0xf]
  %v34 = vld [vmem:[%s0 + $0xc] sm:$0xf]
  %v35 = vunpack.c.l.bf16 %v31
  %v36 = vunpack.c.l.bf16 %v32
  %v37 = vunpack.c.l.bf16 %v33
  %v38 = vunpack.c.l.bf16 %v34
  %vm39 = vcmask 392192
  %v41 = vsel %vm39, %v35, 0
  %v44 = vsel %vm39, %v36, 0
  %v47 = vsel %vm39, %v37, 0
  %v50 = vsel %vm39, %v38, 0
  %52 = vmatprep.subr.mxu0 0.0
  %53 = vmatpush1.msra.mxu0 %v21
  %54 = vmatprep.subr.mxu0 0.0
  %55 = vmatpush1.msra.mxu0 %v22
  %56 = vmatprep.subr.mxu0 0.0
  %57 = vmatpush1.msra.mxu0 %v23
  %58 = vmatprep.subr.mxu0 0.0
  %59 = vmatpush1.msra.mxu0 %v24
  %60 = vmatprep.subr.mxu0 0.0
  %61 = vmatpush1.msra.mxu0 %v25
  %62 = vmatprep.subr.mxu0 0.0
  %63 = vmatpush1.msra.mxu0 %v26
  %64 = vmatprep.subr.mxu0 0.0
  %65 = vmatpush1.msra.mxu0 0.0
  %66 = vmatprep.subr.mxu0 0.0
  %67 = vmatpush1.msra.mxu0 0.0
  %68 = vmatprep.subr.mxu0 0.0
  %69 = vmatpush1.msra.mxu0 0.0
  %70 = vmatprep.subr.mxu0 0.0
  %71 = vmatpush1.msra.mxu0 0.0
  %72 = vmatprep.subr.mxu0 0.0
  %73 = vmatpush1.msra.mxu0 0.0
  %74 = vmatprep.subr.mxu0 0.0
  %75 = vmatpush1.msra.mxu0 0.0
  %76 = vmatprep.subr.mxu0 0.0
  %77 = vmatpush1.msra.mxu0 0.0
  %78 = vmatprep.subr.mxu0 0.0
  %79 = vmatpush1.msra.mxu0 0.0
  %80 = vmatprep.subr.mxu0 0.0
  %81 = vmatpush1.msra.mxu0 0.0
  %82 = vmatprep.subr.mxu0 0.0
  %83 = vmatpush1.msra.mxu0 0.0
  %84 = vmatprep.subr.mxu0 0.0
  %85 = vmatpush1.msra.mxu0 0.0
  %86 = vmatprep.subr.mxu0 0.0
  %87 = vmatpush1.msra.mxu0 0.0
  %88 = vmatprep.subr.mxu0 0.0
  %89 = vmatpush1.msra.mxu0 0.0
  %90 = vmatprep.subr.mxu0 0.0
  %91 = vmatpush1.msra.mxu0 0.0
  %92 = vmatprep.subr.mxu0 0.0
  %93 = vmatpush1.msra.mxu0 0.0
  %94 = vmatprep.subr.mxu0 0.0
  %95 = vmatpush1.msra.mxu0 0.0
  %96 = vmatprep.subr.mxu0 0.0
  %97 = vmatpush1.msra.mxu0 0.0
  %98 = vmatprep.subr.mxu0 0.0
  %99 = vmatpush1.msra.mxu0 0.0
  %100 = vmatprep.subr.mxu0 0.0
  %101 = vmatpush1.msra.mxu0 0.0
  %102 = vmatprep.subr.mxu0 0.0
  %103 = vmatpush1.msra.mxu0 0.0
  %104 = vmatprep.subr.mxu0 0.0
  %105 = vmatpush1.msra.mxu0 0.0
  %106 = vmatprep.subr.mxu0 0.0
  %107 = vmatpush1.msra.mxu0 0.0
  %108 = vmatprep.subr.mxu0 0.0
  %109 = vmatpush1.msra.mxu0 0.0
  %110 = vmatprep.subr.mxu0 0.0
  %111 = vmatpush1.msra.mxu0 0.0
  %112 = vmatprep.subr.mxu0 0.0
  %113 = vmatpush1.msra.mxu0 0.0
  %114 = vmatprep.subr.mxu0 0.0
  %115 = vmatpush1.msra.mxu0 0.0
  %116 = vmatprep.mubr.f32.mxu0 0.0
  %117 = vmatmul.mubr.f32.gmra.mrb[0].mxu0 %v41
  %v118 = vpop.f32.mrb[0].mxu0
  %v119 = vadd.f32 0.0, %v118
  %v120 = vpop.f32.mrb[0].mxu0
  %121 = vmatprep.mubr.f32.mxu0 0.0
  %122 = vmatmul.mubr.f32.gmra.mrb[0].mxu0 %v44
  %v123 = vpop.f32.mrb[0].mxu0
  %v124 = vadd.f32 0.0, %v123
  %v125 = vpop.f32.mrb[0].mxu0
  %126 = vmatprep.mubr.f32.mxu0 0.0
  %127 = vmatmul.mubr.f32.gmra.mrb[0].mxu0 %v47
  %v128 = vpop.f32.mrb[0].mxu0
  %v129 = vadd.f32 0.0, %v128
  %v130 = vpop.f32.mrb[0].mxu0
  %131 = vmatprep.mubr.f32.mxu0 0.0
  %132 = vmatmul.mubr.f32.gmra.mrb[0].mxu0 %v50
  %v133 = vpop.f32.mrb[0].mxu0
  %v134 = vadd.f32 0.0, %v133
  %v135 = vpop.f32.mrb[0].mxu0
  %136 = vdwg.mxu0
  %v137 = vadd.f32 %v27, %v119
  %v138 = vadd.f32 %v28, %v124
  %v139 = vadd.f32 %v29, %v129
  %v140 = vadd.f32 %v30, %v134
  %141 = vst [vmem:[#allocation2] sm:$0xff] %v137
  %142 = vst [vmem:[#allocation2 + $0x8] sm:$0xff] %v138
  %143 = vst [vmem:[#allocation2 + $0x10] sm:$0xff] %v139
  %144 = vst [vmem:[#allocation2 + $0x18] sm:$0xff] %v140
  // Predicated region
  $region14: #{egcf_forward.2} parent=0 // pred_check
    %p145 = pneg %p11
  $region15: #{egcf_forward.2} parent=0 // pred_check_branch
    %147 = sbr.rel (%p145) target = $region17
  $region16: #{egcf_forward.2} parent=0 // pred_region
    %v148 = vld [vmem:[#allocation2] sm:$0xff]
    %v149 = vld [vmem:[#allocation2 + $0x8] sm:$0xff]
    %v150 = vld [vmem:[#allocation2 + $0x10] sm:$0xff]
    %v151 = vld [vmem:[#allocation2 + $0x18] sm:$0xff]
    %v152 = vtanh.pop %v148
    %v153 = vtanh.pop %v149
    %v154 = vtanh.pop %v150
    %v155 = vtanh.pop %v151
    %156 = vst [vmem:[%s2] sm:$0xff] %v152
    %157 = vst [vmem:[%s2 + $0x8] sm:$0xff] %v153
    %158 = vst [vmem:[%s2 + $0x10] sm:$0xff] %v154
    %159 = vst [vmem:[%s2 + $0x18] sm:$0xff] %v155
  $region17: #{egcf_forward.2} parent=0 // pred_fallthru
    _
  // Predicated region
  $region18: #{egcf_forward.2} parent=0 // pred_check
    _
  $region19: #{egcf_forward.2} parent=0 // pred_check_branch
    %161 = sbr.rel (0) target = $region21
  $region20: #{egcf_forward.2} parent=0 // pred_region
    _
  $region21: #{egcf_forward.2} parent=0 // pred_fallthru
    _
  // Predicated region
  $region22: #{egcf_forward.2} parent=0 // pred_check
    _
  $region23: #{egcf_forward.2} parent=0 // pred_check_branch
    %163 = sbr.rel (0) target = $region25
  $region24: #{egcf_forward.2} parent=0 // pred_region
    _
  $region25: #{egcf_forward.2} parent=0 // pred_fallthru
    _

// kernel: egcf_forward.3
$region0: #{egcf_forward.3}
  #allocation0 [shape = 'u32[]', space=smem, size = 0x4, offset = 0x4, fixed_abs, tag = 'smem constant byte address 0x4 - core index']
  #allocation1 [shape = 'u32[144,128]{1,0:T(1,128)}', space=vmem, size = 0x12000, scoped, tag = 'internal scratch']
  #allocation2 [shape = 'f32[2,80,128]{2,1,0:T(8,128)}', space=vmem, size = 0x14000, scoped, tag = 'scratch operand']
  #allocation3 [shape = 'f32[80,128]{1,0:T(8,128)}', space=vmem, size = 0xa000, scoped, tag = 'scratch operand']
  #allocation4 [shape = 'f32[80,128]{1,0:T(8,128)}', space=vmem, size = 0xa000, scoped, tag = 'scratch operand']
  #allocation5 [shape = 's32[1]{0}', space=sflag, size = 0x4, scoped, tag = 'scratch operand']
  #allocation6 [shape = 's32[]', space=sflag, size = 0x4, offset = 0, fixed_abs, tag = 'sflag constant byte address 0x0 - dummy sync flag']
  %s0 = inlined_call_operand.vmem [shape: bf16[80,80], index: 0, kind: input, shape index: {}]
  %s1 = inlined_call_operand.vmem [shape: f32[80,128], index: 1, kind: input, shape index: {}]
  %s2 = inlined_call_operand.vmem [shape: f32[80,128], index: 2, kind: output, shape index: {}]
  %s3 = sld [smem:[#allocation0]]
  $region103: #{egcf_forward.3} parent=0
    _
  %s5 = ssub.s32 1, %s3
  %s6 = scalar_select 0, %s5, %s3
  loop: start=0, step=1, limit=5
  $region2: #{egcf_forward.3} parent=0 // loop_pre_header
    _
  $region3: #{egcf_forward.3} parent=0 // loop_header
    %s8 = sphi 0, %s12
    %p9 = scmp.ge.s32.totalorder %s8, 5
    %s15 = sphi 0, %s34
    %s16 = sphi 0, %s30
    %s17 = sphi 0, %s26
    %s18 = sphi 0, %s15
    %s19 = sphi 0, %s16
    %s20 = sphi 0, %s17
    %s21 = sphi 0, %s18
    %s22 = sphi 0, %s19
    %s23 = sphi 0, %s20
    %s39 = sphi 0, %s41
    %s42 = sphi 0, %s39
    %s43 = sphi 0, %s42
    %s59 = sphi 0, %s43
    %s65 = sphi 0, %s67
    %s68 = sphi 0, %s65
    %s69 = sphi 0, %s68
    %s85 = sphi 0, %s69
  $region4: #{egcf_forward.3} parent=0 // loop_header_branch
    %11 = sbr.rel (%p9) target = $region8
  $region5: #{egcf_forward.3} parent=0 // loop_body
    %s13 = ssub.s32 %s8, 1
    %s14 = ssub.s32 %s8, 2
    %s24 = sadd.s32 1, %s17
    %p25 = scmp.ge.s32.totalorder %s24, 1
    %s26 = scalar_select %p25, 0, %s24
    %s27 = sadd.s32 1, %s16
    %s28 = scalar_select %p25, %s27, %s16
    %p29 = scmp.ge.s32.totalorder %s28, 1
    %s30 = scalar_select %p29, 0, %s28
    %s31 = sadd.s32 1, %s15
    %s32 = scalar_select %p29, %s31, %s15
    %p33 = scmp.ge.s32.totalorder %s32, 3
    %s34 = scalar_select %p33, 0, %s32
    %s35 = ssub.s32 %s16, %s30
    %s36 = ssub.s32 %s17, %s26
    %s37 = sor.u32 %s35, %s36
    %p38 = scmp.eq.s32.totalorder %s37, 0
    %s40 = sadd.s32 %s39, 1
    %s41 = scalar_select %p38, %s39, %s40
    %p44 = pneg %p38
    %p45 = scmp.eq.s32.totalorder %s8, 2
    %p46 = por %p44, %p45
    %p47 = scmp.ne.s32.totalorder %s39, %s42
    %p48 = scmp.eq.s32.totalorder %s8, 0
    %p49 = por %p47, %p48
    %p50 = scmp.ne.s32.totalorder %s39, %s42
    %p51 = scmp.eq.s32.totalorder %s13, 2
    %p52 = por %p50, %p51
    %p53 = scmp.ne.s32.totalorder %s42, %s43
    %p54 = scmp.eq.s32.totalorder %s13, 0
    %p55 = por %p53, %p54
    %p56 = scmp.ne.s32.totalorder %s42, %s43
    %p57 = scmp.eq.s32.totalorder %s14, 2
    %p58 = por %p56, %p57
    %p60 = scmp.ne.s32.totalorder %s43, %s59
    %p61 = scmp.eq.s32.totalorder %s14, 0
    %p62 = por %p60, %p61
    %s63 = ssub.s32 %s16, %s30
    %p64 = scmp.eq.s32.totalorder %s63, 0
    %s66 = sadd.s32 %s65, 1
    %s67 = scalar_select %p64, %s65, %s66
    %p70 = pneg %p64
    %p71 = scmp.eq.s32.totalorder %s8, 2
    %p72 = por %p70, %p71
    %p73 = scmp.ne.s32.totalorder %s65, %s68
    %p74 = scmp.eq.s32.totalorder %s8, 0
    %p75 = por %p73, %p74
    %p76 = scmp.ne.s32.totalorder %s65, %s68
    %p77 = scmp.eq.s32.totalorder %s13, 2
    %p78 = por %p76, %p77
    %p79 = scmp.ne.s32.totalorder %s68, %s69
    %p80 = scmp.eq.s32.totalorder %s13, 0
    %p81 = por %p79, %p80
    %p82 = scmp.ne.s32.totalorder %s68, %s69
    %p83 = scmp.eq.s32.totalorder %s14, 2
    %p84 = por %p82, %p83
    %p86 = scmp.ne.s32.totalorder %s69, %s85
    %p87 = scmp.eq.s32.totalorder %s14, 0
    %p88 = por %p86, %p87
    %p89 = scmp.le.s32.totalorder 1, %s8
    %p90 = scmp.lt.s32.totalorder %s8, 4
    %p91 = pnand %p89, %p90
    %p92 = pneg %p91
    // Predicated region
    $region9: #{egcf_forward.3} parent=5 // pred_check
      _
    $region10: #{egcf_forward.3} parent=5 // pred_check_branch
      %94 = sbr.rel (%p91) target = $region12
    $region11: #{egcf_forward.3} parent=5 // pred_region
      %s95 = ssub.s32 %s8, 1
      // Predicated region
      $region13: #{egcf_forward.3} parent=11 // pred_check
        %p96 = pneg %p55
      $region14: #{egcf_forward.3} parent=11 // pred_check_branch
        %98 = sbr.rel (%p96) target = $region16
      $region15: #{egcf_forward.3} parent=11 // pred_region
        %s99 = smul.u32 10, %s19
        %p100 = scmp.lt.s32.totalorder %s99, 9
        %s101 = scalar_select %p100, %s99, 9
        %p102 = scmp.lt.s32.totalorder %s20, 0
        %s103 = scalar_select %p102, %s20, 0
        %s104 = sadd.s32 %s103, %s101
        %s105 = smul.addr %s104, 4
        %s106 = scalar_lea.vmem %s0, %s105
        %s107 = smul.u32 10, %s19
      $region16: #{egcf_forward.3} parent=11 // pred_fallthru
        _
    $region12: #{egcf_forward.3} parent=5 // pred_fallthru
      _
    %p108 = scmp.lt.s32.totalorder %s8, 3
    // Predicated region
    $region17: #{egcf_forward.3} parent=5 // pred_check
      %p109 = pneg %p108
    $region18: #{egcf_forward.3} parent=5 // pred_check_branch
      %111 = sbr.rel (%p109) target = $region20
    $region19: #{egcf_forward.3} parent=5 // pred_region
      _
    $region20: #{egcf_forward.3} parent=5 // pred_fallthru
      _
    %p112 = scmp.le.s32.totalorder 1, %s8
    %p113 = scmp.lt.s32.totalorder %s8, 4
    %p114 = pnand %p112, %p113
    %p115 = pneg %p114
    // Predicated region
    $region21: #{egcf_forward.3} parent=5 // pred_check
      _
    $region22: #{egcf_forward.3} parent=5 // pred_check_branch
      %117 = sbr.rel (%p114) target = $region24
    $region23: #{egcf_forward.3} parent=5 // pred_region
      %s118 = ssub.s32 %s8, 1
      %s119 = smul.u32 10, %s19
      %p120 = scmp.lt.s32.totalorder %s119, 9
      %s121 = scalar_select %p120, %s119, 9
      %p122 = scmp.lt.s32.totalorder %s20, 0
      %s123 = scalar_select %p122, %s20, 0
      %s124 = sadd.s32 %s123, %s121
      %s125 = smul.addr %s124, 4
      %s126 = scalar_lea.vmem %s0, %s125
      %p127 = pneg %p55
      %p128 = pneg %p52
      %p129 = pneg %p81
      %p130 = pneg %p78
      %s131 = smul.u32 10, %s19
      %p132 = scmp.lt.s32.totalorder %s131, 9
      %s133 = scalar_select %p132, %s131, 9
      %s134 = smul.addr %s133, 8
      %s135 = scalar_lea.vmem %s2, %s134
      %s136 = smul.u32 10, %s19
      %p137 = scmp.lt.s32.totalorder %s136, 9
      %s138 = scalar_select %p137, %s136, 9
      %p139 = scmp.lt.s32.totalorder %s20, 0
      %s140 = scalar_select %p139, %s20, 0
      %s141 = sadd.s32 %s140, %s138
      %s142 = smul.addr %s141, 4
      %s143 = scalar_lea.vmem %s0, %s142
      %s144 = smul.u32 10, %s19
      %s145 = smul.u32 10, %s19
      %p146 = scmp.lt.s32.totalorder %s145, 9
      %s147 = scalar_select %p146, %s145, 9
      %s148 = smul.addr %s147, 8
      %s149 = scalar_lea.vmem %s2, %s148
      %s150 = smul.u32 10, %s19
      %p151 = scmp.eq.s32.totalorder %s18, 0
      %p152 = scmp.eq.s32.totalorder %s19, 0
      %p153 = scmp.eq.s32.totalorder %s20, 0
      %p154 = pnand %p152, %p153
      %p155 = pneg %p154
      %p156 = pnand %p151, %p155
      %p157 = pneg %p156
      // Predicated region
      $region25: #{egcf_forward.3} parent=23 // pred_check
        _
      $region26: #{egcf_forward.3} parent=23 // pred_check_branch
        %159 = sbr.rel (%p156) target = $region28
      $region27: #{egcf_forward.3} parent=23 // pred_region
        %p161 = scmp.lt.u32.totalorder 80, 8
        %p162 = pneg %p161
        // Predicated region
        $region29: #{egcf_forward.3} parent=27 // pred_check
          _
        $region30: #{egcf_forward.3} parent=27 // pred_check_branch
          %164 = sbr.rel (%p161) target = $region32
        $region31: #{egcf_forward.3} parent=27 // pred_region
          %s179 = sand.u32 80, 7
          %p180 = scmp.eq.s32.totalorder %s179, 0
          // Predicated region
          $region44: #{egcf_forward.3} parent=31 // pred_check
            %p181 = pneg %p180
          $region45: #{egcf_forward.3} parent=31 // pred_check_branch
            %183 = sbr.rel (%p181) target = $region47
          $region46: #{egcf_forward.3} parent=31 // pred_region
            loop: start=0, step=1, limit=1
            $region48: #{egcf_forward.3} parent=46 // loop_pre_header
              _
            $region49: #{egcf_forward.3} parent=46 // loop_header
              %s185 = sphi 0, %s189
              %p186 = scmp.ge.s32.totalorder %s185, 1
              %s190 = sphi %s1, %s1
              %s191 = sphi [#allocation2], [#allocation2]
            $region50: #{egcf_forward.3} parent=46 // loop_header_branch
              %188 = sbr.rel (%p186) target = $region54
            $region51: #{egcf_forward.3} parent=46 // loop_body
              %v192 = vld [vmem:[%s190] sm:$0xff]
              %193 = vst [vmem:[%s191] sm:$0xff] %v192
              %v194 = vld [vmem:[%s190 + $0x8] sm:$0xff]
              %195 = vst [vmem:[%s191 + $0x8] sm:$0xff] %v194
              %v196 = vld [vmem:[%s190 + $0x10] sm:$0xff]
              %197 = vst [vmem:[%s191 + $0x10] sm:$0xff] %v196
              %v198 = vld [vmem:[%s190 + $0x18] sm:$0xff]
              %199 = vst [vmem:[%s191 + $0x18] sm:$0xff] %v198
              %v200 = vld [vmem:[%s190 + $0x20] sm:$0xff]
              %201 = vst [vmem:[%s191 + $0x20] sm:$0xff] %v200
              %v202 = vld [vmem:[%s190 + $0x28] sm:$0xff]
              %203 = vst [vmem:[%s191 + $0x28] sm:$0xff] %v202
              %v204 = vld [vmem:[%s190 + $0x30] sm:$0xff]
              %205 = vst [vmem:[%s191 + $0x30] sm:$0xff] %v204
              %v206 = vld [vmem:[%s190 + $0x38] sm:$0xff]
              %207 = vst [vmem:[%s191 + $0x38] sm:$0xff] %v206
              %v208 = vld [vmem:[%s190 + $0x40] sm:$0xff]
              %209 = vst [vmem:[%s191 + $0x40] sm:$0xff] %v208
              %v210 = vld [vmem:[%s190 + $0x48] sm:$0xff]
              %211 = vst [vmem:[%s191 + $0x48] sm:$0xff] %v210
            $region52: #{egcf_forward.3} parent=46 // loop_footer
              %s189 = sadd.s32 1, %s185
            $region53: #{egcf_forward.3} parent=46 // loop_footer_branch
              %184 = sbr.rel target = $region49
            $region54: #{egcf_forward.3} parent=46 // loop_exit
              _
          $region47: #{egcf_forward.3} parent=31 // pred_fallthru
            _
          %p212 = pneg %p180
          // Predicated region
          $region55: #{egcf_forward.3} parent=31 // pred_check
            _
          $region56: #{egcf_forward.3} parent=31 // pred_check_branch
            %214 = sbr.rel (%p180) target = $region58
          $region57: #{egcf_forward.3} parent=31 // pred_region
            %s215 = sand.u32 80, 7
          $region58: #{egcf_forward.3} parent=31 // pred_fallthru
            _
        $region32: #{egcf_forward.3} parent=27 // pred_fallthru
          _
        // Predicated region
        $region33: #{egcf_forward.3} parent=27 // pred_check
          %p165 = pneg %p161
        $region34: #{egcf_forward.3} parent=27 // pred_check_branch
          %167 = sbr.rel (%p165) target = $region36
        $region35: #{egcf_forward.3} parent=27 // pred_region
          %s168 = sshllo.u32 0, 80
          loop: start=0, step=1, limit=1
          $region37: #{egcf_forward.3} parent=35 // loop_pre_header
            _
          $region38: #{egcf_forward.3} parent=35 // loop_header
            %s170 = sphi 0, %s174
            %p171 = scmp.ge.s32.totalorder %s170, 1
            %s175 = sphi %s1, %s1
            %s176 = sphi [#allocation2], [#allocation2]
          $region39: #{egcf_forward.3} parent=35 // loop_header_branch
            %173 = sbr.rel (%p171) target = $region43
          $region40: #{egcf_forward.3} parent=35 // loop_body
            %v177 = vld [vmem:[%s175] sm:%s168]
            %178 = vst [vmem:[%s176] sm:%s168] %v177
          $region41: #{egcf_forward.3} parent=35 // loop_footer
            %s174 = sadd.s32 1, %s170
          $region42: #{egcf_forward.3} parent=35 // loop_footer_branch
            %169 = sbr.rel target = $region38
          $region43: #{egcf_forward.3} parent=35 // loop_exit
            _
        $region36: #{egcf_forward.3} parent=27 // pred_fallthru
          _
        // Predicated region
        $region59: #{egcf_forward.3} parent=27 // pred_check
          _
        $region60: #{egcf_forward.3} parent=27 // pred_check_branch
          %218 = sbr.rel (0) target = $region62
        $region61: #{egcf_forward.3} parent=27 // pred_region
          %219 = vsyncadd [#allocation5], 1280
        $region62: #{egcf_forward.3} parent=27 // pred_fallthru
          _
        %s220 = smul.u32 80, 1
        %s221 = sshll.u32 %s220, 4
        %222 = dma.done [#allocation5], %s221
        %223 = vst [vmem:[#allocation3] sm:$0xff] 0.0
        %224 = vst [vmem:[#allocation3 + $0x8] sm:$0xff] 0.0
        %225 = vst [vmem:[#allocation3 + $0x10] sm:$0xff] 0.0
        %226 = vst [vmem:[#allocation3 + $0x18] sm:$0xff] 0.0
        %227 = vst [vmem:[#allocation3 + $0x20] sm:$0xff] 0.0
        %228 = vst [vmem:[#allocation3 + $0x28] sm:$0xff] 0.0
        %229 = vst [vmem:[#allocation3 + $0x30] sm:$0xff] 0.0
        %230 = vst [vmem:[#allocation3 + $0x38] sm:$0xff] 0.0
        %231 = vst [vmem:[#allocation3 + $0x40] sm:$0xff] 0.0
        %232 = vst [vmem:[#allocation3 + $0x48] sm:$0xff] 0.0
      $region28: #{egcf_forward.3} parent=23 // pred_fallthru
        _
      // Predicated region
      $region63: #{egcf_forward.3} parent=23 // pred_check
        %p233 = pneg %p153
      $region64: #{egcf_forward.3} parent=23 // pred_check_branch
        %235 = sbr.rel (%p233) target = $region66
      $region65: #{egcf_forward.3} parent=23 // pred_region
        %236 = vst [vmem:[#allocation4] sm:$0xff] 0.0
        %237 = vst [vmem:[#allocation4 + $0x8] sm:$0xff] 0.0
        %238 = vst [vmem:[#allocation4 + $0x10] sm:$0xff] 0.0
        %239 = vst [vmem:[#allocation4 + $0x18] sm:$0xff] 0.0
        %240 = vst [vmem:[#allocation4 + $0x20] sm:$0xff] 0.0
        %241 = vst [vmem:[#allocation4 + $0x28] sm:$0xff] 0.0
        %242 = vst [vmem:[#allocation4 + $0x30] sm:$0xff] 0.0
        %243 = vst [vmem:[#allocation4 + $0x38] sm:$0xff] 0.0
        %244 = vst [vmem:[#allocation4 + $0x40] sm:$0xff] 0.0
        %245 = vst [vmem:[#allocation4 + $0x48] sm:$0xff] 0.0
      $region66: #{egcf_forward.3} parent=23 // pred_fallthru
        _
      %s246 = smul.u32 %s19, 80
      %s247 = smul.u32 %s20, 80
      %v248 = vld [vmem:[%s143] sm:$0xf]
      %v249 = vld [vmem:[%s143 + $0x4] sm:$0xf]
      %v250 = vld [vmem:[%s143 + $0x8] sm:$0xf]
      %v251 = vld [vmem:[%s143 + $0xc] sm:$0xf]
      %v252 = vld [vmem:[%s143 + $0x10] sm:$0xf]
      %v253 = vld [vmem:[%s143 + $0x14] sm:$0xf]
      %v254 = vld [vmem:[%s143 + $0x18] sm:$0xf]
      %v255 = vld [vmem:[%s143 + $0x1c] sm:$0xf]
      %v256 = vld [vmem:[%s143 + $0x20] sm:$0xf]
      %v257 = vld [vmem:[%s143 + $0x24] sm:$0xf]
      %v258 = vunpack.c.l.bf16 %v248
      %v259 = vunpack.c.l.bf16 %v249
      %v260 = vunpack.c.l.bf16 %v250
      %v261 = vunpack.c.l.bf16 %v251
      %v262 = vunpack.c.l.bf16 %v252
      %v263 = vunpack.c.l.bf16 %v253
      %v264 = vunpack.c.l.bf16 %v254
      %v265 = vunpack.c.l.bf16 %v255
      %v266 = vunpack.c.l.bf16 %v256
      %v267 = vunpack.c.l.bf16 %v257
      %p268 = scmp.lt.s32.totalorder %s18, 0
      %s269 = ssub.s32 0, %s18
      %s270 = scalar_select %p268, %s269, %s18
      %s271 = sand.u32 %s270, 1
      %s272 = ssub.s32 0, %s271
      %s273 = scalar_select %p268, %s272, %s271
      %p274 = scmp.ne.s32.totalorder %s273, 0
      %p275 = scmp.lt.s32.totalorder %s273, 0
      %p276 = pnand %p275, %p274
      %p277 = pneg %p276
      %s278 = sadd.s32 %s273, 2
      %s279 = scalar_select %p277, %s278, %s273
      %p280 = scmp.eq.s32.totalorder %s279, 0
      // Predicated region
      $region67: #{egcf_forward.3} parent=23 // pred_check
        %p281 = pneg %p280
      $region68: #{egcf_forward.3} parent=23 // pred_check_branch
        %283 = sbr.rel (%p281) target = $region70
      $region69: #{egcf_forward.3} parent=23 // pred_region
        %v284 = vld [vmem:[#allocation4] sm:$0xff]
        %v285 = vld [vmem:[#allocation4 + $0x8] sm:$0xff]
        %v286 = vld [vmem:[#allocation4 + $0x10] sm:$0xff]
        %v287 = vld [vmem:[#allocation4 + $0x18] sm:$0xff]
        %v288 = vld [vmem:[#allocation4 + $0x20] sm:$0xff]
        %v289 = vld [vmem:[#allocation4 + $0x28] sm:$0xff]
        %v290 = vld [vmem:[#allocation4 + $0x30] sm:$0xff]
        %v291 = vld [vmem:[#allocation4 + $0x38] sm:$0xff]
        %v292 = vld [vmem:[#allocation4 + $0x40] sm:$0xff]
        %v293 = vld [vmem:[#allocation4 + $0x48] sm:$0xff]
        %s294 = scalar_lea.vmem [#allocation2], %s247
        %v295 = vld [vmem:[%s294] sm:$0xff]
        %v296 = vld [vmem:[%s294 + $0x8] sm:$0xff]
        %v297 = vld [vmem:[%s294 + $0x10] sm:$0xff]
        %v298 = vld [vmem:[%s294 + $0x18] sm:$0xff]
        %v299 = vld [vmem:[%s294 + $0x20] sm:$0xff]
        %v300 = vld [vmem:[%s294 + $0x28] sm:$0xff]
        %v301 = vld [vmem:[%s294 + $0x30] sm:$0xff]
        %v302 = vld [vmem:[%s294 + $0x38] sm:$0xff]
        %v303 = vld [vmem:[%s294 + $0x40] sm:$0xff]
        %v304 = vld [vmem:[%s294 + $0x48] sm:$0xff]
        %vm305 = vcmask 654336
        %v307 = vsel %vm305, %v258, 0
        %v310 = vsel %vm305, %v259, 0
        %v313 = vsel %vm305, %v260, 0
        %v316 = vsel %vm305, %v261, 0
        %v319 = vsel %vm305, %v262, 0
        %v322 = vsel %vm305, %v263, 0
        %v325 = vsel %vm305, %v264, 0
        %v328 = vsel %vm305, %v265, 0
        %v331 = vsel %vm305, %v266, 0
        %v334 = vsel %vm305, %v267, 0
        %336 = vmatprep.subr.mxu0 0.0
        %337 = vmatpush1.msra.mxu0 %v295
        %338 = vmatprep.subr.mxu0 0.0
        %339 = vmatpush1.msra.mxu0 %v296
        %340 = vmatprep.subr.mxu0 0.0
        %341 = vmatpush1.msra.mxu0 %v297
        %342 = vmatprep.subr.mxu0 0.0
        %343 = vmatpush1.msra.mxu0 %v298
        %344 = vmatprep.subr.mxu0 0.0
        %345 = vmatpush1.msra.mxu0 %v299
        %346 = vmatprep.subr.mxu0 0.0
        %347 = vmatpush1.msra.mxu0 %v300
        %348 = vmatprep.subr.mxu0 0.0
        %349 = vmatpush1.msra.mxu0 %v301
        %350 = vmatprep.subr.mxu0 0.0
        %351 = vmatpush1.msra.mxu0 %v302
        %352 = vmatprep.subr.mxu0 0.0
        %353 = vmatpush1.msra.mxu0 %v303
        %354 = vmatprep.subr.mxu0 0.0
        %355 = vmatpush1.msra.mxu0 %v304
        %356 = vmatprep.subr.mxu0 0.0
        %357 = vmatpush1.msra.mxu0 0.0
        %358 = vmatprep.subr.mxu0 0.0
        %359 = vmatpush1.msra.mxu0 0.0
        %360 = vmatprep.subr.mxu0 0.0
        %361 = vmatpush1.msra.mxu0 0.0
        %362 = vmatprep.subr.mxu0 0.0
        %363 = vmatpush1.msra.mxu0 0.0
        %364 = vmatprep.subr.mxu0 0.0
        %365 = vmatpush1.msra.mxu0 0.0
        %366 = vmatprep.subr.mxu0 0.0
        %367 = vmatpush1.msra.mxu0 0.0
        %368 = vmatprep.subr.mxu0 0.0
        %369 = vmatpush1.msra.mxu0 0.0
        %370 = vmatprep.subr.mxu0 0.0
        %371 = vmatpush1.msra.mxu0 0.0
        %372 = vmatprep.subr.mxu0 0.0
        %373 = vmatpush1.msra.mxu0 0.0
        %374 = vmatprep.subr.mxu0 0.0
        %375 = vmatpush1.msra.mxu0 0.0
        %376 = vmatprep.subr.mxu0 0.0
        %377 = vmatpush1.msra.mxu0 0.0
        %378 = vmatprep.subr.mxu0 0.0
        %379 = vmatpush1.msra.mxu0 0.0
        %380 = vmatprep.subr.mxu0 0.0
        %381 = vmatpush1.msra.mxu0 0.0
        %382 = vmatprep.subr.mxu0 0.0
        %383 = vmatpush1.msra.mxu0 0.0
        %384 = vmatprep.subr.mxu0 0.0
        %385 = vmatpush1.msra.mxu0 0.0
        %386 = vmatprep.subr.mxu0 0.0
        %387 = vmatpush1.msra.mxu0 0.0
        %388 = vmatprep.subr.mxu0 0.0
        %389 = vmatpush1.msra.mxu0 0.0
        %390 = vmatprep.subr.mxu0 0.0
        %391 = vmatpush1.msra.mxu0 0.0
        %392 = vmatprep.subr.mxu0 0.0
        %393 = vmatpush1.msra.mxu0 0.0
        %394 = vmatprep.subr.mxu0 0.0
        %395 = vmatpush1.msra.mxu0 0.0
        %396 = vmatprep.subr.mxu0 0.0
        %397 = vmatpush1.msra.mxu0 0.0
        %398 = vmatprep.subr.mxu0 0.0
        %399 = vmatpush1.msra.mxu0 0.0
        %400 = vmatprep.mubr.f32.mxu0 0.0
        %401 = vmatmul.mubr.f32.gmra.mrb[0].mxu0 %v307
        %v402 = vpop.f32.mrb[0].mxu0
        %v403 = vadd.f32 0.0, %v402
        %v404 = vpop.f32.mrb[0].mxu0
        %405 = vmatprep.mubr.f32.mxu0 0.0
        %406 = vmatmul.mubr.f32.gmra.mrb[0].mxu0 %v310
        %v407 = vpop.f32.mrb[0].mxu0
        %v408 = vadd.f32 0.0, %v407
        %v409 = vpop.f32.mrb[0].mxu0
        %410 = vmatprep.mubr.f32.mxu0 0.0
        %411 = vmatmul.mubr.f32.gmra.mrb[0].mxu0 %v313
        %v412 = vpop.f32.mrb[0].mxu0
        %v413 = vadd.f32 0.0, %v412
        %v414 = vpop.f32.mrb[0].mxu0
        %415 = vmatprep.mubr.f32.mxu0 0.0
        %416 = vmatmul.mubr.f32.gmra.mrb[0].mxu0 %v316
        %v417 = vpop.f32.mrb[0].mxu0
        %v418 = vadd.f32 0.0, %v417
        %v419 = vpop.f32.mrb[0].mxu0
        %420 = vmatprep.mubr.f32.mxu0 0.0
        %421 = vmatmul.mubr.f32.gmra.mrb[0].mxu0 %v319
        %v422 = vpop.f32.mrb[0].mxu0
        %v423 = vadd.f32 0.0, %v422
        %v424 = vpop.f32.mrb[0].mxu0
        %425 = vmatprep.mubr.f32.mxu0 0.0
        %426 = vmatmul.mubr.f32.gmra.mrb[0].mxu0 %v322
        %v427 = vpop.f32.mrb[0].mxu0
        %v428 = vadd.f32 0.0, %v427
        %v429 = vpop.f32.mrb[0].mxu0
        %430 = vmatprep.mubr.f32.mxu0 0.0
        %431 = vmatmul.mubr.f32.gmra.mrb[0].mxu0 %v325
        %v432 = vpop.f32.mrb[0].mxu0
        %v433 = vadd.f32 0.0, %v432
        %v434 = vpop.f32.mrb[0].mxu0
        %435 = vmatprep.mubr.f32.mxu0 0.0
        %436 = vmatmul.mubr.f32.gmra.mrb[0].mxu0 %v328
        %v437 = vpop.f32.mrb[0].mxu0
        %v438 = vadd.f32 0.0, %v437
        %v439 = vpop.f32.mrb[0].mxu0
        %440 = vmatprep.mubr.f32.mxu0 0.0
        %441 = vmatmul.mubr.f32.gmra.mrb[0].mxu0 %v331
        %v442 = vpop.f32.mrb[0].mxu0
        %v443 = vadd.f32 0.0, %v442
        %v444 = vpop.f32.mrb[0].mxu0
        %445 = vmatprep.mubr.f32.mxu0 0.0
        %446 = vmatmul.mubr.f32.gmra.mrb[0].mxu0 %v334
        %v447 = vpop.f32.mrb[0].mxu0
        %v448 = vadd.f32 0.0, %v447
        %v449 = vpop.f32.mrb[0].mxu0
        %450 = vdwg.mxu0
        %v451 = vadd.f32 %v284, %v403
        %v452 = vadd.f32 %v285, %v408
        %v453 = vadd.f32 %v286, %v413
        %v454 = vadd.f32 %v287, %v418
        %v455 = vadd.f32 %v288, %v423
        %v456 = vadd.f32 %v289, %v428
        %v457 = vadd.f32 %v290, %v433
        %v458 = vadd.f32 %v291, %v438
        %v459 = vadd.f32 %v292, %v443
        %v460 = vadd.f32 %v293, %v448
        %461 = vst [vmem:[#allocation4] sm:$0xff] %v451
        %462 = vst [vmem:[#allocation4 + $0x8] sm:$0xff] %v452
        %463 = vst [vmem:[#allocation4 + $0x10] sm:$0xff] %v453
        %464 = vst [vmem:[#allocation4 + $0x18] sm:$0xff] %v454
        %465 = vst [vmem:[#allocation4 + $0x20] sm:$0xff] %v455
        %466 = vst [vmem:[#allocation4 + $0x28] sm:$0xff] %v456
        %467 = vst [vmem:[#allocation4 + $0x30] sm:$0xff] %v457
        %468 = vst [vmem:[#allocation4 + $0x38] sm:$0xff] %v458
        %469 = vst [vmem:[#allocation4 + $0x40] sm:$0xff] %v459
        %470 = vst [vmem:[#allocation4 + $0x48] sm:$0xff] %v460
        // Predicated region
        $region71: #{egcf_forward.3} parent=69 // pred_check
          %p471 = pneg %p153
        $region72: #{egcf_forward.3} parent=69 // pred_check_branch
          %473 = sbr.rel (%p471) target = $region74
        $region73: #{egcf_forward.3} parent=69 // pred_region
          %v474 = vld [vmem:[#allocation4] sm:$0xff]
          %v475 = vld [vmem:[#allocation4 + $0x8] sm:$0xff]
          %v476 = vld [vmem:[#allocation4 + $0x10] sm:$0xff]
          %v477 = vld [vmem:[#allocation4 + $0x18] sm:$0xff]
          %v478 = vld [vmem:[#allocation4 + $0x20] sm:$0xff]
          %v479 = vld [vmem:[#allocation4 + $0x28] sm:$0xff]
          %v480 = vld [vmem:[#allocation4 + $0x30] sm:$0xff]
          %v481 = vld [vmem:[#allocation4 + $0x38] sm:$0xff]
          %v482 = vld [vmem:[#allocation4 + $0x40] sm:$0xff]
          %v483 = vld [vmem:[#allocation4 + $0x48] sm:$0xff]
          %v484 = vtanh.pop %v474
          %v485 = vtanh.pop %v475
          %v486 = vtanh.pop %v476
          %v487 = vtanh.pop %v477
          %v488 = vtanh.pop %v478
          %v489 = vtanh.pop %v479
          %v490 = vtanh.pop %v480
          %v491 = vtanh.pop %v481
          %v492 = vtanh.pop %v482
          %v493 = vtanh.pop %v483
          %s494 = sadd.s32 %s246, 80
          %s495 = scalar_lea.vmem [#allocation2], %s494
          %496 = vst [vmem:[%s495] sm:$0xff] %v484
          %497 = vst [vmem:[%s495 + $0x8] sm:$0xff] %v485
          %498 = vst [vmem:[%s495 + $0x10] sm:$0xff] %v486
          %499 = vst [vmem:[%s495 + $0x18] sm:$0xff] %v487
          %500 = vst [vmem:[%s495 + $0x20] sm:$0xff] %v488
          %501 = vst [vmem:[%s495 + $0x28] sm:$0xff] %v489
          %502 = vst [vmem:[%s495 + $0x30] sm:$0xff] %v490
          %503 = vst [vmem:[%s495 + $0x38] sm:$0xff] %v491
          %504 = vst [vmem:[%s495 + $0x40] sm:$0xff] %v492
          %505 = vst [vmem:[%s495 + $0x48] sm:$0xff] %v493
          %s506 = scalar_lea.vmem [#allocation3], %s246
          %v507 = vld [vmem:[%s506] sm:$0xff]
          %v508 = vld [vmem:[%s506 + $0x8] sm:$0xff]
          %v509 = vld [vmem:[%s506 + $0x10] sm:$0xff]
          %v510 = vld [vmem:[%s506 + $0x18] sm:$0xff]
          %v511 = vld [vmem:[%s506 + $0x20] sm:$0xff]
          %v512 = vld [vmem:[%s506 + $0x28] sm:$0xff]
          %v513 = vld [vmem:[%s506 + $0x30] sm:$0xff]
          %v514 = vld [vmem:[%s506 + $0x38] sm:$0xff]
          %v515 = vld [vmem:[%s506 + $0x40] sm:$0xff]
          %v516 = vld [vmem:[%s506 + $0x48] sm:$0xff]
          %v517 = vadd.f32 %v507, %v484
          %v518 = vadd.f32 %v508, %v485
          %v519 = vadd.f32 %v509, %v486
          %v520 = vadd.f32 %v510, %v487
          %v521 = vadd.f32 %v511, %v488
          %v522 = vadd.f32 %v512, %v489
          %v523 = vadd.f32 %v513, %v490
          %v524 = vadd.f32 %v514, %v491
          %v525 = vadd.f32 %v515, %v492
          %v526 = vadd.f32 %v516, %v493
          %527 = vst [vmem:[%s506] sm:$0xff] %v517
          %528 = vst [vmem:[%s506 + $0x8] sm:$0xff] %v518
          %529 = vst [vmem:[%s506 + $0x10] sm:$0xff] %v519
          %530 = vst [vmem:[%s506 + $0x18] sm:$0xff] %v520
          %531 = vst [vmem:[%s506 + $0x20] sm:$0xff] %v521
          %532 = vst [vmem:[%s506 + $0x28] sm:$0xff] %v522
          %533 = vst [vmem:[%s506 + $0x30] sm:$0xff] %v523
          %534 = vst [vmem:[%s506 + $0x38] sm:$0xff] %v524
          %535 = vst [vmem:[%s506 + $0x40] sm:$0xff] %v525
          %536 = vst [vmem:[%s506 + $0x48] sm:$0xff] %v526
          %p537 = scmp.eq.s32.totalorder %s18, 2
          // Predicated region
          $region75: #{egcf_forward.3} parent=73 // pred_check
            %p538 = pneg %p537
          $region76: #{egcf_forward.3} parent=73 // pred_check_branch
            %540 = sbr.rel (%p538) target = $region78
          $region77: #{egcf_forward.3} parent=73 // pred_region
            %541 = vst [vmem:[%s149] sm:$0xff] %v517
            %542 = vst [vmem:[%s149 + $0x8] sm:$0xff] %v518
            %543 = vst [vmem:[%s149 + $0x10] sm:$0xff] %v519
            %544 = vst [vmem:[%s149 + $0x18] sm:$0xff] %v520
            %545 = vst [vmem:[%s149 + $0x20] sm:$0xff] %v521
            %546 = vst [vmem:[%s149 + $0x28] sm:$0xff] %v522
            %547 = vst [vmem:[%s149 + $0x30] sm:$0xff] %v523
            %548 = vst [vmem:[%s149 + $0x38] sm:$0xff] %v524
            %549 = vst [vmem:[%s149 + $0x40] sm:$0xff] %v525
            %550 = vst [vmem:[%s149 + $0x48] sm:$0xff] %v526
          $region78: #{egcf_forward.3} parent=73 // pred_fallthru
            _
        $region74: #{egcf_forward.3} parent=69 // pred_fallthru
          _
      $region70: #{egcf_forward.3} parent=23 // pred_fallthru
        _
      %p551 = scmp.eq.s32.totalorder %s279, 1
      // Predicated region
      $region79: #{egcf_forward.3} parent=23 // pred_check
        %p552 = pneg %p551
      $region80: #{egcf_forward.3} parent=23 // pred_check_branch
        %554 = sbr.rel (%p552) target = $region82
      $region81: #{egcf_forward.3} parent=23 // pred_region
        %v555 = vld [vmem:[#allocation4] sm:$0xff]
        %v556 = vld [vmem:[#allocation4 + $0x8] sm:$0xff]
        %v557 = vld [vmem:[#allocation4 + $0x10] sm:$0xff]
        %v558 = vld [vmem:[#allocation4 + $0x18] sm:$0xff]
        %v559 = vld [vmem:[#allocation4 + $0x20] sm:$0xff]
        %v560 = vld [vmem:[#allocation4 + $0x28] sm:$0xff]
        %v561 = vld [vmem:[#allocation4 + $0x30] sm:$0xff]
        %v562 = vld [vmem:[#allocation4 + $0x38] sm:$0xff]
        %v563 = vld [vmem:[#allocation4 + $0x40] sm:$0xff]
        %v564 = vld [vmem:[#allocation4 + $0x48] sm:$0xff]
        %s565 = sadd.s32 %s247, 80
        %s566 = scalar_lea.vmem [#allocation2], %s565
        %v567 = vld [vmem:[%s566] sm:$0xff]
        %v568 = vld [vmem:[%s566 + $0x8] sm:$0xff]
        %v569 = vld [vmem:[%s566 + $0x10] sm:$0xff]
        %v570 = vld [vmem:[%s566 + $0x18] sm:$0xff]
        %v571 = vld [vmem:[%s566 + $0x20] sm:$0xff]
        %v572 = vld [vmem:[%s566 + $0x28] sm:$0xff]
        %v573 = vld [vmem:[%s566 + $0x30] sm:$0xff]
        %v574 = vld [vmem:[%s566 + $0x38] sm:$0xff]
        %v575 = vld [vmem:[%s566 + $0x40] sm:$0xff]
        %v576 = vld [vmem:[%s566 + $0x48] sm:$0xff]
        %vm577 = vcmask 654336
        %v579 = vsel %vm577, %v258, 0
        %v582 = vsel %vm577, %v259, 0
        %v585 = vsel %vm577, %v260, 0
        %v588 = vsel %vm577, %v261, 0
        %v591 = vsel %vm577, %v262, 0
        %v594 = vsel %vm577, %v263, 0
        %v597 = vsel %vm577, %v264, 0
        %v600 = vsel %vm577, %v265, 0
        %v603 = vsel %vm577, %v266, 0
        %v606 = vsel %vm577, %v267, 0
        %608 = vmatprep.subr.mxu0 0.0
        %609 = vmatpush1.msra.mxu0 %v567
        %610 = vmatprep.subr.mxu0 0.0
        %611 = vmatpush1.msra.mxu0 %v568
        %612 = vmatprep.subr.mxu0 0.0
        %613 = vmatpush1.msra.mxu0 %v569
        %614 = vmatprep.subr.mxu0 0.0
        %615 = vmatpush1.msra.mxu0 %v570
        %616 = vmatprep.subr.mxu0 0.0
        %617 = vmatpush1.msra.mxu0 %v571
        %618 = vmatprep.subr.mxu0 0.0
        %619 = vmatpush1.msra.mxu0 %v572
        %620 = vmatprep.subr.mxu0 0.0
        %621 = vmatpush1.msra.mxu0 %v573
        %622 = vmatprep.subr.mxu0 0.0
        %623 = vmatpush1.msra.mxu0 %v574
        %624 = vmatprep.subr.mxu0 0.0
        %625 = vmatpush1.msra.mxu0 %v575
        %626 = vmatprep.subr.mxu0 0.0
        %627 = vmatpush1.msra.mxu0 %v576
        %628 = vmatprep.subr.mxu0 0.0
        %629 = vmatpush1.msra.mxu0 0.0
        %630 = vmatprep.subr.mxu0 0.0
        %631 = vmatpush1.msra.mxu0 0.0
        %632 = vmatprep.subr.mxu0 0.0
        %633 = vmatpush1.msra.mxu0 0.0
        %634 = vmatprep.subr.mxu0 0.0
        %635 = vmatpush1.msra.mxu0 0.0
        %636 = vmatprep.subr.mxu0 0.0
        %637 = vmatpush1.msra.mxu0 0.0
        %638 = vmatprep.subr.mxu0 0.0
        %639 = vmatpush1.msra.mxu0 0.0
        %640 = vmatprep.subr.mxu0 0.0
        %641 = vmatpush1.msra.mxu0 0.0
        %642 = vmatprep.subr.mxu0 0.0
        %643 = vmatpush1.msra.mxu0 0.0
        %644 = vmatprep.subr.mxu0 0.0
        %645 = vmatpush1.msra.mxu0 0.0
        %646 = vmatprep.subr.mxu0 0.0
        %647 = vmatpush1.msra.mxu0 0.0
        %648 = vmatprep.subr.mxu0 0.0
        %649 = vmatpush1.msra.mxu0 0.0
        %650 = vmatprep.subr.mxu0 0.0
        %651 = vmatpush1.msra.mxu0 0.0
        %652 = vmatprep.subr.mxu0 0.0
        %653 = vmatpush1.msra.mxu0 0.0
        %654 = vmatprep.subr.mxu0 0.0
        %655 = vmatpush1.msra.mxu0 0.0
        %656 = vmatprep.subr.mxu0 0.0
        %657 = vmatpush1.msra.mxu0 0.0
        %658 = vmatprep.subr.mxu0 0.0
        %659 = vmatpush1.msra.mxu0 0.0
        %660 = vmatprep.subr.mxu0 0.0
        %661 = vmatpush1.msra.mxu0 0.0
        %662 = vmatprep.subr.mxu0 0.0
        %663 = vmatpush1.msra.mxu0 0.0
        %664 = vmatprep.subr.mxu0 0.0
        %665 = vmatpush1.msra.mxu0 0.0
        %666 = vmatprep.subr.mxu0 0.0
        %667 = vmatpush1.msra.mxu0 0.0
        %668 = vmatprep.subr.mxu0 0.0
        %669 = vmatpush1.msra.mxu0 0.0
        %670 = vmatprep.subr.mxu0 0.0
        %671 = vmatpush1.msra.mxu0 0.0
        %672 = vmatprep.mubr.f32.mxu0 0.0
        %673 = vmatmul.mubr.f32.gmra.mrb[0].mxu0 %v579
        %v674 = vpop.f32.mrb[0].mxu0
        %v675 = vadd.f32 0.0, %v674
        %v676 = vpop.f32.mrb[0].mxu0
        %677 = vmatprep.mubr.f32.mxu0 0.0
        %678 = vmatmul.mubr.f32.gmra.mrb[0].mxu0 %v582
        %v679 = vpop.f32.mrb[0].mxu0
        %v680 = vadd.f32 0.0, %v679
        %v681 = vpop.f32.mrb[0].mxu0
        %682 = vmatprep.mubr.f32.mxu0 0.0
        %683 = vmatmul.mubr.f32.gmra.mrb[0].mxu0 %v585
        %v684 = vpop.f32.mrb[0].mxu0
        %v685 = vadd.f32 0.0, %v684
        %v686 = vpop.f32.mrb[0].mxu0
        %687 = vmatprep.mubr.f32.mxu0 0.0
        %688 = vmatmul.mubr.f32.gmra.mrb[0].mxu0 %v588
        %v689 = vpop.f32.mrb[0].mxu0
        %v690 = vadd.f32 0.0, %v689
        %v691 = vpop.f32.mrb[0].mxu0
        %692 = vmatprep.mubr.f32.mxu0 0.0
        %693 = vmatmul.mubr.f32.gmra.mrb[0].mxu0 %v591
        %v694 = vpop.f32.mrb[0].mxu0
        %v695 = vadd.f32 0.0, %v694
        %v696 = vpop.f32.mrb[0].mxu0
        %697 = vmatprep.mubr.f32.mxu0 0.0
        %698 = vmatmul.mubr.f32.gmra.mrb[0].mxu0 %v594
        %v699 = vpop.f32.mrb[0].mxu0
        %v700 = vadd.f32 0.0, %v699
        %v701 = vpop.f32.mrb[0].mxu0
        %702 = vmatprep.mubr.f32.mxu0 0.0
        %703 = vmatmul.mubr.f32.gmra.mrb[0].mxu0 %v597
        %v704 = vpop.f32.mrb[0].mxu0
        %v705 = vadd.f32 0.0, %v704
        %v706 = vpop.f32.mrb[0].mxu0
        %707 = vmatprep.mubr.f32.mxu0 0.0
        %708 = vmatmul.mubr.f32.gmra.mrb[0].mxu0 %v600
        %v709 = vpop.f32.mrb[0].mxu0
        %v710 = vadd.f32 0.0, %v709
        %v711 = vpop.f32.mrb[0].mxu0
        %712 = vmatprep.mubr.f32.mxu0 0.0
        %713 = vmatmul.mubr.f32.gmra.mrb[0].mxu0 %v603
        %v714 = vpop.f32.mrb[0].mxu0
        %v715 = vadd.f32 0.0, %v714
        %v716 = vpop.f32.mrb[0].mxu0
        %717 = vmatprep.mubr.f32.mxu0 0.0
        %718 = vmatmul.mubr.f32.gmra.mrb[0].mxu0 %v606
        %v719 = vpop.f32.mrb[0].mxu0
        %v720 = vadd.f32 0.0, %v719
        %v721 = vpop.f32.mrb[0].mxu0
        %722 = vdwg.mxu0
        %v723 = vadd.f32 %v555, %v675
        %v724 = vadd.f32 %v556, %v680
        %v725 = vadd.f32 %v557, %v685
        %v726 = vadd.f32 %v558, %v690
        %v727 = vadd.f32 %v559, %v695
        %v728 = vadd.f32 %v560, %v700
        %v729 = vadd.f32 %v561, %v705
        %v730 = vadd.f32 %v562, %v710
        %v731 = vadd.f32 %v563, %v715
        %v732 = vadd.f32 %v564, %v720
        %733 = vst [vmem:[#allocation4] sm:$0xff] %v723
        %734 = vst [vmem:[#allocation4 + $0x8] sm:$0xff] %v724
        %735 = vst [vmem:[#allocation4 + $0x10] sm:$0xff] %v725
        %736 = vst [vmem:[#allocation4 + $0x18] sm:$0xff] %v726
        %737 = vst [vmem:[#allocation4 + $0x20] sm:$0xff] %v727
        %738 = vst [vmem:[#allocation4 + $0x28] sm:$0xff] %v728
        %739 = vst [vmem:[#allocation4 + $0x30] sm:$0xff] %v729
        %740 = vst [vmem:[#allocation4 + $0x38] sm:$0xff] %v730
        %741 = vst [vmem:[#allocation4 + $0x40] sm:$0xff] %v731
        %742 = vst [vmem:[#allocation4 + $0x48] sm:$0xff] %v732
        // Predicated region
        $region83: #{egcf_forward.3} parent=81 // pred_check
          %p743 = pneg %p153
        $region84: #{egcf_forward.3} parent=81 // pred_check_branch
          %745 = sbr.rel (%p743) target = $region86
        $region85: #{egcf_forward.3} parent=81 // pred_region
          %v746 = vld [vmem:[#allocation4] sm:$0xff]
          %v747 = vld [vmem:[#allocation4 + $0x8] sm:$0xff]
          %v748 = vld [vmem:[#allocation4 + $0x10] sm:$0xff]
          %v749 = vld [vmem:[#allocation4 + $0x18] sm:$0xff]
          %v750 = vld [vmem:[#allocation4 + $0x20] sm:$0xff]
          %v751 = vld [vmem:[#allocation4 + $0x28] sm:$0xff]
          %v752 = vld [vmem:[#allocation4 + $0x30] sm:$0xff]
          %v753 = vld [vmem:[#allocation4 + $0x38] sm:$0xff]
          %v754 = vld [vmem:[#allocation4 + $0x40] sm:$0xff]
          %v755 = vld [vmem:[#allocation4 + $0x48] sm:$0xff]
          %v756 = vtanh.pop %v746
          %v757 = vtanh.pop %v747
          %v758 = vtanh.pop %v748
          %v759 = vtanh.pop %v749
          %v760 = vtanh.pop %v750
          %v761 = vtanh.pop %v751
          %v762 = vtanh.pop %v752
          %v763 = vtanh.pop %v753
          %v764 = vtanh.pop %v754
          %v765 = vtanh.pop %v755
          %s766 = scalar_lea.vmem [#allocation2], %s246
          %767 = vst [vmem:[%s766] sm:$0xff] %v756
          %768 = vst [vmem:[%s766 + $0x8] sm:$0xff] %v757
          %769 = vst [vmem:[%s766 + $0x10] sm:$0xff] %v758
          %770 = vst [vmem:[%s766 + $0x18] sm:$0xff] %v759
          %771 = vst [vmem:[%s766 + $0x20] sm:$0xff] %v760
          %772 = vst [vmem:[%s766 + $0x28] sm:$0xff] %v761
          %773 = vst [vmem:[%s766 + $0x30] sm:$0xff] %v762
          %774 = vst [vmem:[%s766 + $0x38] sm:$0xff] %v763
          %775 = vst [vmem:[%s766 + $0x40] sm:$0xff] %v764
          %776 = vst [vmem:[%s766 + $0x48] sm:$0xff] %v765
          %s777 = scalar_lea.vmem [#allocation3], %s246
          %v778 = vld [vmem:[%s777] sm:$0xff]
          %v779 = vld [vmem:[%s777 + $0x8] sm:$0xff]
          %v780 = vld [vmem:[%s777 + $0x10] sm:$0xff]
          %v781 = vld [vmem:[%s777 + $0x18] sm:$0xff]
          %v782 = vld [vmem:[%s777 + $0x20] sm:$0xff]
          %v783 = vld [vmem:[%s777 + $0x28] sm:$0xff]
          %v784 = vld [vmem:[%s777 + $0x30] sm:$0xff]
          %v785 = vld [vmem:[%s777 + $0x38] sm:$0xff]
          %v786 = vld [vmem:[%s777 + $0x40] sm:$0xff]
          %v787 = vld [vmem:[%s777 + $0x48] sm:$0xff]
          %v788 = vadd.f32 %v778, %v756
          %v789 = vadd.f32 %v779, %v757
          %v790 = vadd.f32 %v780, %v758
          %v791 = vadd.f32 %v781, %v759
          %v792 = vadd.f32 %v782, %v760
          %v793 = vadd.f32 %v783, %v761
          %v794 = vadd.f32 %v784, %v762
          %v795 = vadd.f32 %v785, %v763
          %v796 = vadd.f32 %v786, %v764
          %v797 = vadd.f32 %v787, %v765
          %798 = vst [vmem:[%s777] sm:$0xff] %v788
          %799 = vst [vmem:[%s777 + $0x8] sm:$0xff] %v789
          %800 = vst [vmem:[%s777 + $0x10] sm:$0xff] %v790
          %801 = vst [vmem:[%s777 + $0x18] sm:$0xff] %v791
          %802 = vst [vmem:[%s777 + $0x20] sm:$0xff] %v792
          %803 = vst [vmem:[%s777 + $0x28] sm:$0xff] %v793
          %804 = vst [vmem:[%s777 + $0x30] sm:$0xff] %v794
          %805 = vst [vmem:[%s777 + $0x38] sm:$0xff] %v795
          %806 = vst [vmem:[%s777 + $0x40] sm:$0xff] %v796
          %807 = vst [vmem:[%s777 + $0x48] sm:$0xff] %v797
          %p808 = scmp.eq.s32.totalorder %s18, 2
          // Predicated region
          $region87: #{egcf_forward.3} parent=85 // pred_check
            %p809 = pneg %p808
          $region88: #{egcf_forward.3} parent=85 // pred_check_branch
            %811 = sbr.rel (%p809) target = $region90
          $region89: #{egcf_forward.3} parent=85 // pred_region
            %812 = vst [vmem:[%s149] sm:$0xff] %v788
            %813 = vst [vmem:[%s149 + $0x8] sm:$0xff] %v789
            %814 = vst [vmem:[%s149 + $0x10] sm:$0xff] %v790
            %815 = vst [vmem:[%s149 + $0x18] sm:$0xff] %v791
            %816 = vst [vmem:[%s149 + $0x20] sm:$0xff] %v792
            %817 = vst [vmem:[%s149 + $0x28] sm:$0xff] %v793
            %818 = vst [vmem:[%s149 + $0x30] sm:$0xff] %v794
            %819 = vst [vmem:[%s149 + $0x38] sm:$0xff] %v795
            %820 = vst [vmem:[%s149 + $0x40] sm:$0xff] %v796
            %821 = vst [vmem:[%s149 + $0x48] sm:$0xff] %v797
          $region90: #{egcf_forward.3} parent=85 // pred_fallthru
            _
        $region86: #{egcf_forward.3} parent=81 // pred_fallthru
          _
      $region82: #{egcf_forward.3} parent=23 // pred_fallthru
        _
      %s822 = smul.u32 10, %s19
      %p823 = scmp.lt.s32.totalorder %s822, 9
      %s824 = scalar_select %p823, %s822, 9
      %s825 = smul.addr %s824, 8
      %s826 = scalar_lea.vmem %s2, %s825
      // Predicated region
      $region91: #{egcf_forward.3} parent=23 // pred_check
        %p827 = pneg %p78
      $region92: #{egcf_forward.3} parent=23 // pred_check_branch
        %829 = sbr.rel (%p827) target = $region94
      $region93: #{egcf_forward.3} parent=23 // pred_region
        %s830 = smul.u32 10, %s19
      $region94: #{egcf_forward.3} parent=23 // pred_fallthru
        _
      // Predicated region
      $region95: #{egcf_forward.3} parent=23 // pred_check
        %p831 = pneg %p78
      $region96: #{egcf_forward.3} parent=23 // pred_check_branch
        %833 = sbr.rel (%p831) target = $region98
      $region97: #{egcf_forward.3} parent=23 // pred_region
        %s834 = smul.u32 10, %s19
        %p835 = scmp.lt.s32.totalorder %s834, 9
        %s836 = scalar_select %p835, %s834, 9
        %s837 = smul.addr %s836, 8
        %s838 = scalar_lea.vmem %s2, %s837
      $region98: #{egcf_forward.3} parent=23 // pred_fallthru
        _
    $region24: #{egcf_forward.3} parent=5 // pred_fallthru
      _
    %p839 = scmp.le.s32.totalorder 2, %s8
    // Predicated region
    $region99: #{egcf_forward.3} parent=5 // pred_check
      %p840 = pneg %p839
    $region100: #{egcf_forward.3} parent=5 // pred_check_branch
      %842 = sbr.rel (%p840) target = $region102
    $region101: #{egcf_forward.3} parent=5 // pred_region
      %s843 = ssub.s32 %s8, 2
    $region102: #{egcf_forward.3} parent=5 // pred_fallthru
      _
  $region6: #{egcf_forward.3} parent=0 // loop_footer
    %s12 = sadd.s32 1, %s8
  $region7: #{egcf_forward.3} parent=0 // loop_footer_branch
    %7 = sbr.rel target = $region3
  $region8: #{egcf_forward.3} parent=0 // loop_exit
    _
  %844 = vsyncmov [#allocation5]
  %s845 = vpop.sfrf %844
  %p846 = scmp.eq.s32.totalorder %s845, 0
  %p847 = pneg %p846
  %849 = shalt.err (%p847)

</llo_original>
